<compile_context>
chip_gen: v7x
topology: tpu7x:2x2x1
jax: 0.10.0
libtpu: 0.0.40
codegen_flags: <defaults>
</compile_context>

<pallas_src>
import functools

import jax
import jax.numpy as jnp
import numpy as np
from jax.experimental import pallas as pl
from jax.experimental.pallas import tpu as pltpu


_MXU_F_THRESHOLD = 8      # use the MXU distance expansion only when F > this
_HEAD_MATMUL_MIN_O = 8    # use an MXU matmul for the linear head when O >= this


def _rbf_network_kernel(*refs, gamma, use_mxu, head_matmul, cross_bf16):
    it = iter(refs)
    x_ref = next(it)                     # (tn, F) f32 batch tile
    ct_ref = next(it)                    # (F, C)  f32 centers, transposed
    w_ref = next(it)                     # (O, C)  f32 nn.Linear weight
    b_ref = next(it)                     # (1, O)  f32 nn.Linear bias
    c2_ref = next(it) if use_mxu else None        # (1, C) |centers|^2
    wt_ref = next(it) if head_matmul else None    # (C, O) weight^T (MXU head)
    out_ref = next(it)                   # (tn, O)
    rbf_ref = next(it)                   # (tn, O*C) lane-dense slab

    x = x_ref[...]
    ct = ct_ref[...]
    w = w_ref[...]
    b = b_ref[...]

    tn, F = x.shape
    O, C = w.shape

    if use_mxu:
        # ||x - c||^2 = |x|^2 + |c|^2 - 2 x.c  (cross term on the MXU).
        x2 = jnp.sum(x * x, axis=1, keepdims=True)                   # (tn, 1)
        c2 = c2_ref[...]                                             # (1, C)
        if cross_bf16:
            # bf16 MXU cross term (f32 accumulation); opt-in, large F only.
            xc = jnp.dot(x.astype(jnp.bfloat16), ct.astype(jnp.bfloat16),
                         preferred_element_type=jnp.float32)         # (tn, C)
        else:
            xc = jnp.dot(x, ct, preferred_element_type=jnp.float32)  # (tn, C)
        d2 = jnp.maximum(x2 + c2 - 2.0 * xc, 0.0)
    else:
        # Small F: exact diff formulation on the VPU (no cancellation),
        # unrolled over the static feature dimension.
        d2 = jnp.zeros((tn, C), jnp.float32)
        for f in range(F):
            diff = x[:, f:f + 1] - ct[f:f + 1, :]                    # (tn, C)
            d2 = d2 + diff * diff

    basis = jnp.exp(d2 * gamma)                                      # (tn, C), EUP

    if head_matmul:
        # One MXU matmul for the head; keeps the 2 XLUs free for layout work.
        head = jnp.dot(basis, wt_ref[...],
                       preferred_element_type=jnp.float32)           # (tn, O)
    else:
        head_cols = []

    # rbf slab: columns [o*C:(o+1)*C] hold basis * W[o]. Stored directly into
    # static slices (no concatenate, no O live copies in VMEM).
    for o in range(O):
        col = basis * w[o:o + 1, :]                                  # (tn, C)
        if O == 1:
            rbf_ref[...] = col.astype(rbf_ref.dtype)
        else:
            rbf_ref[:, o * C:(o + 1) * C] = col.astype(rbf_ref.dtype)
        if not head_matmul:
            # Reuse basis*W[o] via an XLU lane reduction (no second matmul at
            # tiny O where the MXU would be ~1% utilized).
            head_cols.append(jnp.sum(col, axis=1, keepdims=True))    # (tn, 1)

    if not head_matmul:
        head = head_cols[0] if O == 1 else jnp.concatenate(head_cols, axis=1)

    out_ref[...] = head + b


def _tpu_vmem_profile():
    """Generation-aware (tile_budget_bytes, vmem_limit_bytes, multi_tc)."""
    kind = ""
    try:
        devs = jax.devices()
        if devs:
            kind = (getattr(devs[0], "device_kind", "") or "").lower()
    except Exception:  # pragma: no cover - defensive
        pass
    if "v7" in kind or "7x" in kind:
        # v7x: 64 MiB VMEM per TensorCore, 2 TCs share the 'parallel' axis.
        return 40 << 20, 56 << 20, True
    if any(t in kind for t in ("v4", "v5", "v6")):
        # 128 MiB VMEM parts, single TensorCore owns the whole grid.
        return 72 << 20, 96 << 20, False
    # Unknown part: stay conservative.
    return 24 << 20, 32 << 20, False


def _choose_tile(N, F, C, O, tn_req, rbf_elem_bytes, tile_budget_bytes,
                 multi_tc, invariant_bytes):
    """Batch tile: as large as requested, capped so double-buffered per-step
    tiles PLUS the double-buffered grid-invariant operands stay inside the
    generation's VMEM budget; rounded to a multiple of 8.  The multi-step
    split is only forced on multi-TC parts (v7x)."""
    per_row = 2 * (4 * F + 4 * O + rbf_elem_bytes * O * C)   # x, out, rbf tiles (2x buffered)
    avail = max(tile_budget_bytes - 2 * invariant_bytes, 8 * per_row)
    cap = max(8, (avail // per_row) // 8 * 8)
    n_up = -(-N // 8) * 8
    tn = max(8, (min(int(tn_req), cap, n_up) // 8) * 8)
    if multi_tc and N > 8:
        # v7x: keep an even, balanced step count so neither core sits idle.
        steps = -(-N // tn)
        if steps < 2:
            tn = max(8, (-(-N // 2) + 7) // 8 * 8)
        elif steps % 2 and steps <= 8:
            tn = max(8, (-(-N // (steps + 1)) + 7) // 8 * 8)
    return tn


def rbf_network_forward(x, centers, weight, bias, sigma, *, tn=1024,
                        rbf_dtype=jnp.float32, cross_term_bf16=False):
    """out, rbf = RBFNetwork(x).

    x: (N, F); centers: (C, F); weight: (O, C); bias: (O,); sigma static scalar.
    Returns out (N, O) f32 and rbf ((N, C) if O == 1 else (N, O, C)) in
    `rbf_dtype` (f32 default; bf16 opt-in halves the dominant HBM writeback).
    """
    x = jnp.asarray(x, jnp.float32)
    centers = jnp.asarray(centers, jnp.float32)
    weight = jnp.asarray(weight, jnp.float32)
    bias = jnp.asarray(bias, jnp.float32)

    N, F = x.shape
    C, Fc = centers.shape
    O, Cw = weight.shape
    assert Fc == F and Cw == C and bias.shape == (O,)

    use_mxu = F > _MXU_F_THRESHOLD
    head_matmul = O >= _HEAD_MATMUL_MIN_O
    rbf_elem = jnp.dtype(rbf_dtype).itemsize

    # Grid-invariant operand bytes (each double-buffered by the pipeline).
    invariant_bytes = 4 * (F * C + O * C + O)                 # centers^T, W, bias
    if use_mxu:
        invariant_bytes += 4 * C                              # |c|^2
    if head_matmul:
        invariant_bytes += 4 * C * O                          # W^T

    tile_budget, vmem_limit, multi_tc = _tpu_vmem_profile()
    tn = _choose_tile(N, F, C, O, tn, rbf_elem, tile_budget, multi_tc,
                      invariant_bytes)

    n_pad = -(-N // tn) * tn
    if n_pad != N:
        # TODO(synk): for very large F, handle the ragged tail in-kernel (row
        # mask on the last grid step) instead of this extra HBM pass over x.
        x = jnp.pad(x, ((0, n_pad - N), (0, 0)))

    # Grid-invariant preprocessing hoisted out of the kernel (runs once in XLA
    # instead of once per grid step).
    centers_t = centers.T                                  # (F, C): contracting dim minor
    bias_row = bias.reshape(1, O)
    gamma = -1.0 / (2.0 * float(sigma) * float(sigma))     # exp(d2 * gamma); sigma static

    inputs = [x, centers_t, weight, bias_row]
    in_specs = [
        pl.BlockSpec((tn, F), lambda i: (i, 0)),           # x tile
        pl.BlockSpec((F, C), lambda i: (0, 0)),            # centers^T (invariant)
        pl.BlockSpec((O, C), lambda i: (0, 0)),            # linear weight (invariant)
        pl.BlockSpec((1, O), lambda i: (0, 0)),            # linear bias (invariant)
    ]
    if use_mxu:
        inputs.append(jnp.sum(centers * centers, axis=1)[None, :])   # (1, C)
        in_specs.append(pl.BlockSpec((1, C), lambda i: (0, 0)))
    if head_matmul:
        inputs.append(weight.T)                                       # (C, O)
        in_specs.append(pl.BlockSpec((C, O), lambda i: (0, 0)))

    # Advisory cost estimate: bytes dominated by the rbf slab writeback.
    bytes_accessed = (n_pad * F * 4 + n_pad * O * 4
                      + n_pad * O * C * rbf_elem + invariant_bytes)
    flops_per_row = (2 * F * C if use_mxu else 3 * F * C) + 3 * O * C + 4 * C
    cost = pl.CostEstimate(flops=int(n_pad * flops_per_row),
                           transcendentals=int(n_pad * C),
                           bytes_accessed=int(bytes_accessed))

    kernel = functools.partial(_rbf_network_kernel, gamma=gamma,
                               use_mxu=use_mxu, head_matmul=head_matmul,
                               cross_bf16=bool(cross_term_bf16))

    out_full, rbf_flat = pl.pallas_call(
        kernel,
        out_shape=(
            jax.ShapeDtypeStruct((n_pad, O), jnp.float32),
            jax.ShapeDtypeStruct((n_pad, O * C), rbf_dtype),   # lane-dense rbf slab
        ),
        grid=(n_pad // tn,),
        in_specs=in_specs,
        out_specs=(
            pl.BlockSpec((tn, O), lambda i: (i, 0)),
            pl.BlockSpec((tn, O * C), lambda i: (i, 0)),
        ),
        compiler_params=pltpu.CompilerParams(
            dimension_semantics=("parallel",),
            vmem_limit_bytes=vmem_limit,
        ),
        cost_estimate=cost,
    )(*inputs)

    out = out_full[:N]                                     # (N, O)
    rbf = rbf_flat[:N]                                     # (N, O*C)
    if O != 1:
        rbf = rbf.reshape(N, O, C)                         # O == 1 stays (N, C) == squeeze(1)
    return out, rbf


def _reference_forward(x, centers, weight, bias, sigma):
    diff = x[:, None, :] - centers[None, :, :]             # (N, C, F)
    d2 = jnp.sum(diff * diff, axis=2)                      # (N, C)
    basis = jnp.exp(-d2 / (2.0 * sigma * sigma))           # (N, C)
    rbf = basis[:, None, :] * weight[None, :, :]           # (N, O, C)
    out = jnp.sum(rbf, axis=2) + bias[None, :]             # == basis @ W.T + b
    if weight.shape[0] == 1:
        rbf = jnp.squeeze(rbf, axis=1)
    return out, rbf


if __name__ == "__main__":
    # Shapes follow the module's own usage: x = linspace(-2, 2, 1000).unsqueeze(1),
    # in_features=1, num_centers=100, out_features=1, sigma=0.1.
    N, F, C, O = 1000, 1, 100, 1
    sigma = 0.1

    key = jax.random.PRNGKey(0)
    kc, kw, kb = jax.random.split(key, 3)

    x = jnp.linspace(-2.0, 2.0, N, dtype=jnp.float32).reshape(N, F)
    # RBF.reset_parameters: centers ~ U(-1, 1)
    centers = jax.random.uniform(kc, (C, F), jnp.float32, minval=-1.0, maxval=1.0)
    # nn.Linear default init: U(-1/sqrt(C), 1/sqrt(C))
    bound = 1.0 / np.sqrt(C)
    weight = jax.random.uniform(kw, (O, C), jnp.float32, minval=-bound, maxval=bound)
    bias = jax.random.uniform(kb, (O,), jnp.float32, minval=-bound, maxval=bound)

    out, rbf = rbf_network_forward(x, centers, weight, bias, sigma)
    out = jax.block_until_ready(out)
    rbf = jax.block_until_ready(rbf)

    out_ref, rbf_ref = _reference_forward(x, centers, weight, bias, sigma)
    np.testing.assert_allclose(np.asarray(out), np.asarray(out_ref), rtol=1e-5, atol=1e-5)
    np.testing.assert_allclose(np.asarray(rbf), np.asarray(rbf_ref), rtol=1e-5, atol=1e-5)

    print("KERNEL_OK")
</pallas_src>

<mosaic_0001>
module attributes {stable_mosaic.version = 11 : i64} {
  func.func @_rbf_network_kernel(%arg0: i32, %arg1: memref<1000x1xf32, #tpu.memory_space<vmem>>, %arg2: memref<1x100xf32, #tpu.memory_space<vmem>>, %arg3: memref<1x100xf32, #tpu.memory_space<vmem>>, %arg4: memref<1x1xf32, #tpu.memory_space<vmem>>, %arg5: memref<1000x1xf32, #tpu.memory_space<vmem>>, %arg6: memref<1000x100xf32, #tpu.memory_space<vmem>>) attributes {dimension_semantics = [#tpu.dimension_semantics<parallel>], iteration_bounds = array<i64: 1>, scalar_prefetch = 0 : i64, scratch_operands = 0 : i64, tpu.core_type = #tpu.core_type<tc>, window_params = [{transform_indices = @transform_0, window_bounds = array<i64: 1000, 1>}, {pipeline_mode = #tpu.pipeline_mode<synchronous>, transform_indices = @transform_1, window_bounds = array<i64: 1, 100>}, {pipeline_mode = #tpu.pipeline_mode<synchronous>, transform_indices = @transform_2, window_bounds = array<i64: 1, 100>}, {pipeline_mode = #tpu.pipeline_mode<synchronous>, transform_indices = @transform_3, window_bounds = array<i64: 1, 1>}, {transform_indices = @transform_4, window_bounds = array<i64: 1000, 1>}, {transform_indices = @transform_5, window_bounds = array<i64: 1000, 100>}]} {
    %c0 = arith.constant 0 : index
    %c0_0 = arith.constant 0 : index
    %0 = vector.load %arg1[%c0, %c0_0] : memref<1000x1xf32, #tpu.memory_space<vmem>>, vector<1000x1xf32>
    %c0_1 = arith.constant 0 : index
    %c0_2 = arith.constant 0 : index
    %1 = vector.load %arg2[%c0_1, %c0_2] : memref<1x100xf32, #tpu.memory_space<vmem>>, vector<1x100xf32>
    %c0_3 = arith.constant 0 : index
    %c0_4 = arith.constant 0 : index
    %2 = vector.load %arg3[%c0_3, %c0_4] : memref<1x100xf32, #tpu.memory_space<vmem>>, vector<1x100xf32>
    %c0_5 = arith.constant 0 : index
    %c0_6 = arith.constant 0 : index
    %3 = vector.load %arg4[%c0_5, %c0_6] : memref<1x1xf32, #tpu.memory_space<vmem>>, vector<1x1xf32>
    %cst = arith.constant 0.000000e+00 : f32
    %4 = vector.broadcast %cst : f32 to vector<1000x100xf32>
    %5 = vector.broadcast %0 : vector<1000x1xf32> to vector<1000x100xf32>
    %6 = vector.broadcast %1 : vector<1x100xf32> to vector<1000x100xf32>
    %7 = arith.subf %5, %6 : vector<1000x100xf32>
    %8 = arith.mulf %7, %7 : vector<1000x100xf32>
    %9 = arith.addf %4, %8 : vector<1000x100xf32>
    %cst_7 = arith.constant -5.000000e+01 : f32
    %10 = vector.broadcast %cst_7 : f32 to vector<1000x100xf32>
    %11 = arith.mulf %9, %10 : vector<1000x100xf32>
    %12 = math.exp %11 : vector<1000x100xf32>
    %13 = vector.broadcast %2 : vector<1x100xf32> to vector<1000x100xf32>
    %14 = arith.mulf %12, %13 : vector<1000x100xf32>
    %c0_8 = arith.constant 0 : index
    %c0_9 = arith.constant 0 : index
    %15 = vector.load %arg6[%c0_8, %c0_9] : memref<1000x100xf32, #tpu.memory_space<vmem>>, vector<1000x100xf32>
    tpu.vector_store %arg6[%c0_8, %c0_9], %14 {strides = array<i32>} : memref<1000x100xf32, #tpu.memory_space<vmem>>, vector<1000x100xf32>,
    %cst_10 = arith.constant dense<0.000000e+00> : vector<1000xf32>
    %16 = vector.multi_reduction <add>, %14, %cst_10 [1] : vector<1000x100xf32> to vector<1000xf32>
    %17 = vector.shape_cast %16 : vector<1000xf32> to vector<1000x1xf32>
    %18 = vector.broadcast %3 : vector<1x1xf32> to vector<1000x1xf32>
    %19 = arith.addf %17, %18 : vector<1000x1xf32>
    %c0_11 = arith.constant 0 : index
    %c0_12 = arith.constant 0 : index
    %20 = vector.load %arg5[%c0_11, %c0_12] : memref<1000x1xf32, #tpu.memory_space<vmem>>, vector<1000x1xf32>
    tpu.vector_store %arg5[%c0_11, %c0_12], %19 {strides = array<i32>} : memref<1000x1xf32, #tpu.memory_space<vmem>>, vector<1000x1xf32>,
    return
  }
  func.func @transform_0(%arg0: i32) -> (i32, i32) {
    %c0_i32 = arith.constant 0 : i32
    %c0_i32_0 = arith.constant 0 : i32
    return %arg0, %c0_i32 : i32, i32
  }
  func.func @transform_1(%arg0: i32) -> (i32, i32) {
    %c0_i32 = arith.constant 0 : i32
    %c0_i32_0 = arith.constant 0 : i32
    %c0_i32_1 = arith.constant 0 : i32
    return %c0_i32, %c0_i32_0 : i32, i32
  }
  func.func @transform_2(%arg0: i32) -> (i32, i32) {
    %c0_i32 = arith.constant 0 : i32
    %c0_i32_0 = arith.constant 0 : i32
    %c0_i32_1 = arith.constant 0 : i32
    return %c0_i32, %c0_i32_0 : i32, i32
  }
  func.func @transform_3(%arg0: i32) -> (i32, i32) {
    %c0_i32 = arith.constant 0 : i32
    %c0_i32_0 = arith.constant 0 : i32
    %c0_i32_1 = arith.constant 0 : i32
    return %c0_i32, %c0_i32_0 : i32, i32
  }
  func.func @transform_4(%arg0: i32) -> (i32, i32) {
    %c0_i32 = arith.constant 0 : i32
    %c0_i32_0 = arith.constant 0 : i32
    return %arg0, %c0_i32 : i32, i32
  }
  func.func @transform_5(%arg0: i32) -> (i32, i32) {
    %c0_i32 = arith.constant 0 : i32
    %c0_i32_0 = arith.constant 0 : i32
    return %arg0, %c0_i32 : i32, i32
  }
}

</mosaic_0001>

<llo_original>
// kernel: tpu_custom_call.1
$region0: #{tpu_custom_call.1}
  #allocation0 [shape = 'u32[]', space=smem, size = 0x4, offset = 0x4, fixed_abs, tag = 'smem constant byte address 0x4 - core index']
  #allocation1 [shape = 'u32[144,128]{1,0:T(1,128)}', space=vmem, size = 0x12000, scoped, tag = 'internal scratch']
  #allocation2 [shape = 'f32[1,1]{1,0:T(1,128)S(1)}', space=vmem, size = 0x200, scoped, tag = 'scoped memory for tpu_custom_call.1']
  %s0 = inlined_call_operand.vmem [shape: f32[1000,1], index: 0, kind: input, shape index: {}]
  %s1 = inlined_call_operand.vmem [shape: f32[1,100], index: 1, kind: input, shape index: {}]
  %s2 = inlined_call_operand.vmem [shape: f32[1,100], index: 2, kind: input, shape index: {}]
  %s3 = inlined_call_operand.<no memory space> [shape: f32[1,1], index: 3, kind: input, shape index: {}]
  %s4 = inlined_call_operand.vmem [shape: f32[1000,1], index: 4, kind: output, shape index: {0}]
  %s5 = inlined_call_operand.vmem [shape: f32[1000,100], index: 5, kind: output, shape index: {1}]
  %6 = xla_tuple %s4, %s5
  %s7 = sld [smem:[#allocation0]]
  $region34: #{tpu_custom_call.1} parent=0
    _
  %s9 = ssub.s32 1, %s7
  %s10 = scalar_select 0, %s9, %s7
  %v11 = vstv %s3
  %12 = vst [vmem:[#allocation2] sm:$0x1] %v11
  // Predicated region
  $region2: #{tpu_custom_call.1} parent=0 // pred_check
    _
  $region3: #{tpu_custom_call.1} parent=0 // pred_check_branch
    %14 = sbr.rel (0) target = $region5
  $region4: #{tpu_custom_call.1} parent=0 // pred_region
    _
  $region5: #{tpu_custom_call.1} parent=0 // pred_fallthru
    _
  // Predicated region
  $region6: #{tpu_custom_call.1} parent=0 // pred_check
    _
  $region7: #{tpu_custom_call.1} parent=0 // pred_check_branch
    %16 = sbr.rel (0) target = $region9
  $region8: #{tpu_custom_call.1} parent=0 // pred_region
    _
  $region9: #{tpu_custom_call.1} parent=0 // pred_fallthru
    _
  // Predicated region
  $region10: #{tpu_custom_call.1} parent=0 // pred_check
    _
  $region11: #{tpu_custom_call.1} parent=0 // pred_check_branch
    %18 = sbr.rel (0) target = $region13
  $region12: #{tpu_custom_call.1} parent=0 // pred_region
    _
  $region13: #{tpu_custom_call.1} parent=0 // pred_fallthru
    _
  // Predicated region
  $region14: #{tpu_custom_call.1} parent=0 // pred_check
    _
  $region15: #{tpu_custom_call.1} parent=0 // pred_check_branch
    %20 = sbr.rel (0) target = $region17
  $region16: #{tpu_custom_call.1} parent=0 // pred_region
    _
  $region17: #{tpu_custom_call.1} parent=0 // pred_fallthru
    _
  %v21 = vld [vmem:[%s0] sm:$0xff]
  %v22 = vld [vmem:[%s0 + $0x8] sm:$0xff]
  %v23 = vld [vmem:[%s0 + $0x10] sm:$0xff]
  %v24 = vld [vmem:[%s0 + $0x18] sm:$0xff]
  %v25 = vld [vmem:[%s0 + $0x20] sm:$0xff]
  %v26 = vld [vmem:[%s0 + $0x28] sm:$0xff]
  %v27 = vld [vmem:[%s0 + $0x30] sm:$0xff]
  %v28 = vld [vmem:[%s0 + $0x38] sm:$0xff]
  %v29 = vld [vmem:[%s0 + $0x40] sm:$0xff]
  %v30 = vld [vmem:[%s0 + $0x48] sm:$0xff]
  %v31 = vld [vmem:[%s0 + $0x50] sm:$0xff]
  %v32 = vld [vmem:[%s0 + $0x58] sm:$0xff]
  %v33 = vld [vmem:[%s0 + $0x60] sm:$0xff]
  %v34 = vld [vmem:[%s0 + $0x68] sm:$0xff]
  %v35 = vld [vmem:[%s0 + $0x70] sm:$0xff]
  %v36 = vld [vmem:[%s0 + $0x78] sm:$0xff]
  %v37 = vld [vmem:[%s0 + $0x80] sm:$0xff]
  %v38 = vld [vmem:[%s0 + $0x88] sm:$0xff]
  %v39 = vld [vmem:[%s0 + $0x90] sm:$0xff]
  %v40 = vld [vmem:[%s0 + $0x98] sm:$0xff]
  %v41 = vld [vmem:[%s0 + $0xa0] sm:$0xff]
  %v42 = vld [vmem:[%s0 + $0xa8] sm:$0xff]
  %v43 = vld [vmem:[%s0 + $0xb0] sm:$0xff]
  %v44 = vld [vmem:[%s0 + $0xb8] sm:$0xff]
  %v45 = vld [vmem:[%s0 + $0xc0] sm:$0xff]
  %v46 = vld [vmem:[%s0 + $0xc8] sm:$0xff]
  %v47 = vld [vmem:[%s0 + $0xd0] sm:$0xff]
  %v48 = vld [vmem:[%s0 + $0xd8] sm:$0xff]
  %v49 = vld [vmem:[%s0 + $0xe0] sm:$0xff]
  %v50 = vld [vmem:[%s0 + $0xe8] sm:$0xff]
  %v51 = vld [vmem:[%s0 + $0xf0] sm:$0xff]
  %v52 = vld [vmem:[%s0 + $0xf8] sm:$0xff]
  %v53 = vld [vmem:[%s0 + $0x100] sm:$0xff]
  %v54 = vld [vmem:[%s0 + $0x108] sm:$0xff]
  %v55 = vld [vmem:[%s0 + $0x110] sm:$0xff]
  %v56 = vld [vmem:[%s0 + $0x118] sm:$0xff]
  %v57 = vld [vmem:[%s0 + $0x120] sm:$0xff]
  %v58 = vld [vmem:[%s0 + $0x128] sm:$0xff]
  %v59 = vld [vmem:[%s0 + $0x130] sm:$0xff]
  %v60 = vld [vmem:[%s0 + $0x138] sm:$0xff]
  %v61 = vld [vmem:[%s0 + $0x140] sm:$0xff]
  %v62 = vld [vmem:[%s0 + $0x148] sm:$0xff]
  %v63 = vld [vmem:[%s0 + $0x150] sm:$0xff]
  %v64 = vld [vmem:[%s0 + $0x158] sm:$0xff]
  %v65 = vld [vmem:[%s0 + $0x160] sm:$0xff]
  %v66 = vld [vmem:[%s0 + $0x168] sm:$0xff]
  %v67 = vld [vmem:[%s0 + $0x170] sm:$0xff]
  %v68 = vld [vmem:[%s0 + $0x178] sm:$0xff]
  %v69 = vld [vmem:[%s0 + $0x180] sm:$0xff]
  %v70 = vld [vmem:[%s0 + $0x188] sm:$0xff]
  %v71 = vld [vmem:[%s0 + $0x190] sm:$0xff]
  %v72 = vld [vmem:[%s0 + $0x198] sm:$0xff]
  %v73 = vld [vmem:[%s0 + $0x1a0] sm:$0xff]
  %v74 = vld [vmem:[%s0 + $0x1a8] sm:$0xff]
  %v75 = vld [vmem:[%s0 + $0x1b0] sm:$0xff]
  %v76 = vld [vmem:[%s0 + $0x1b8] sm:$0xff]
  %v77 = vld [vmem:[%s0 + $0x1c0] sm:$0xff]
  %v78 = vld [vmem:[%s0 + $0x1c8] sm:$0xff]
  %v79 = vld [vmem:[%s0 + $0x1d0] sm:$0xff]
  %v80 = vld [vmem:[%s0 + $0x1d8] sm:$0xff]
  %v81 = vld [vmem:[%s0 + $0x1e0] sm:$0xff]
  %v82 = vld [vmem:[%s0 + $0x1e8] sm:$0xff]
  %v83 = vld [vmem:[%s0 + $0x1f0] sm:$0xff]
  %v84 = vld [vmem:[%s0 + $0x1f8] sm:$0xff]
  %v85 = vld [vmem:[%s0 + $0x200] sm:$0xff]
  %v86 = vld [vmem:[%s0 + $0x208] sm:$0xff]
  %v87 = vld [vmem:[%s0 + $0x210] sm:$0xff]
  %v88 = vld [vmem:[%s0 + $0x218] sm:$0xff]
  %v89 = vld [vmem:[%s0 + $0x220] sm:$0xff]
  %v90 = vld [vmem:[%s0 + $0x228] sm:$0xff]
  %v91 = vld [vmem:[%s0 + $0x230] sm:$0xff]
  %v92 = vld [vmem:[%s0 + $0x238] sm:$0xff]
  %v93 = vld [vmem:[%s0 + $0x240] sm:$0xff]
  %v94 = vld [vmem:[%s0 + $0x248] sm:$0xff]
  %v95 = vld [vmem:[%s0 + $0x250] sm:$0xff]
  %v96 = vld [vmem:[%s0 + $0x258] sm:$0xff]
  %v97 = vld [vmem:[%s0 + $0x260] sm:$0xff]
  %v98 = vld [vmem:[%s0 + $0x268] sm:$0xff]
  %v99 = vld [vmem:[%s0 + $0x270] sm:$0xff]
  %v100 = vld [vmem:[%s0 + $0x278] sm:$0xff]
  %v101 = vld [vmem:[%s0 + $0x280] sm:$0xff]
  %v102 = vld [vmem:[%s0 + $0x288] sm:$0xff]
  %v103 = vld [vmem:[%s0 + $0x290] sm:$0xff]
  %v104 = vld [vmem:[%s0 + $0x298] sm:$0xff]
  %v105 = vld [vmem:[%s0 + $0x2a0] sm:$0xff]
  %v106 = vld [vmem:[%s0 + $0x2a8] sm:$0xff]
  %v107 = vld [vmem:[%s0 + $0x2b0] sm:$0xff]
  %v108 = vld [vmem:[%s0 + $0x2b8] sm:$0xff]
  %v109 = vld [vmem:[%s0 + $0x2c0] sm:$0xff]
  %v110 = vld [vmem:[%s0 + $0x2c8] sm:$0xff]
  %v111 = vld [vmem:[%s0 + $0x2d0] sm:$0xff]
  %v112 = vld [vmem:[%s0 + $0x2d8] sm:$0xff]
  %v113 = vld [vmem:[%s0 + $0x2e0] sm:$0xff]
  %v114 = vld [vmem:[%s0 + $0x2e8] sm:$0xff]
  %v115 = vld [vmem:[%s0 + $0x2f0] sm:$0xff]
  %v116 = vld [vmem:[%s0 + $0x2f8] sm:$0xff]
  %v117 = vld [vmem:[%s0 + $0x300] sm:$0xff]
  %v118 = vld [vmem:[%s0 + $0x308] sm:$0xff]
  %v119 = vld [vmem:[%s0 + $0x310] sm:$0xff]
  %v120 = vld [vmem:[%s0 + $0x318] sm:$0xff]
  %v121 = vld [vmem:[%s0 + $0x320] sm:$0xff]
  %v122 = vld [vmem:[%s0 + $0x328] sm:$0xff]
  %v123 = vld [vmem:[%s0 + $0x330] sm:$0xff]
  %v124 = vld [vmem:[%s0 + $0x338] sm:$0xff]
  %v125 = vld [vmem:[%s0 + $0x340] sm:$0xff]
  %v126 = vld [vmem:[%s0 + $0x348] sm:$0xff]
  %v127 = vld [vmem:[%s0 + $0x350] sm:$0xff]
  %v128 = vld [vmem:[%s0 + $0x358] sm:$0xff]
  %v129 = vld [vmem:[%s0 + $0x360] sm:$0xff]
  %v130 = vld [vmem:[%s0 + $0x368] sm:$0xff]
  %v131 = vld [vmem:[%s0 + $0x370] sm:$0xff]
  %v132 = vld [vmem:[%s0 + $0x378] sm:$0xff]
  %v133 = vld [vmem:[%s0 + $0x380] sm:$0xff]
  %v134 = vld [vmem:[%s0 + $0x388] sm:$0xff]
  %v135 = vld [vmem:[%s0 + $0x390] sm:$0xff]
  %v136 = vld [vmem:[%s0 + $0x398] sm:$0xff]
  %v137 = vld [vmem:[%s0 + $0x3a0] sm:$0xff]
  %v138 = vld [vmem:[%s0 + $0x3a8] sm:$0xff]
  %v139 = vld [vmem:[%s0 + $0x3b0] sm:$0xff]
  %v140 = vld [vmem:[%s0 + $0x3b8] sm:$0xff]
  %v141 = vld [vmem:[%s0 + $0x3c0] sm:$0xff]
  %v142 = vld [vmem:[%s0 + $0x3c8] sm:$0xff]
  %v143 = vld [vmem:[%s0 + $0x3d0] sm:$0xff]
  %v144 = vld [vmem:[%s0 + $0x3d8] sm:$0xff]
  %v145 = vld [vmem:[%s0 + $0x3e0] sm:$0xff]
  %v146 = vld [vmem:[%s1] sm:$0x1]
  %v147 = vld [vmem:[%s2] sm:$0x1]
  %v148 = vld [vmem:[#allocation2] sm:$0x1]
  %150 = vset.pattern.permute.xlu0 0
  %151 = vperm.xlu0 %150, %v21
  %v152 = vpop.permute.xlu0 %151
  %155 = vset.pattern.permute.xlu0 0
  %156 = vperm.xlu0 %155, %v22
  %v157 = vpop.permute.xlu0 %156
  %160 = vset.pattern.permute.xlu0 0
  %161 = vperm.xlu0 %160, %v23
  %v162 = vpop.permute.xlu0 %161
  %165 = vset.pattern.permute.xlu0 0
  %166 = vperm.xlu0 %165, %v24
  %v167 = vpop.permute.xlu0 %166
  %170 = vset.pattern.permute.xlu0 0
  %171 = vperm.xlu0 %170, %v25
  %v172 = vpop.permute.xlu0 %171
  %175 = vset.pattern.permute.xlu0 0
  %176 = vperm.xlu0 %175, %v26
  %v177 = vpop.permute.xlu0 %176
  %180 = vset.pattern.permute.xlu0 0
  %181 = vperm.xlu0 %180, %v27
  %v182 = vpop.permute.xlu0 %181
  %185 = vset.pattern.permute.xlu0 0
  %186 = vperm.xlu0 %185, %v28
  %v187 = vpop.permute.xlu0 %186
  %190 = vset.pattern.permute.xlu0 0
  %191 = vperm.xlu0 %190, %v29
  %v192 = vpop.permute.xlu0 %191
  %195 = vset.pattern.permute.xlu0 0
  %196 = vperm.xlu0 %195, %v30
  %v197 = vpop.permute.xlu0 %196
  %200 = vset.pattern.permute.xlu0 0
  %201 = vperm.xlu0 %200, %v31
  %v202 = vpop.permute.xlu0 %201
  %205 = vset.pattern.permute.xlu0 0
  %206 = vperm.xlu0 %205, %v32
  %v207 = vpop.permute.xlu0 %206
  %210 = vset.pattern.permute.xlu0 0
  %211 = vperm.xlu0 %210, %v33
  %v212 = vpop.permute.xlu0 %211
  %215 = vset.pattern.permute.xlu0 0
  %216 = vperm.xlu0 %215, %v34
  %v217 = vpop.permute.xlu0 %216
  %220 = vset.pattern.permute.xlu0 0
  %221 = vperm.xlu0 %220, %v35
  %v222 = vpop.permute.xlu0 %221
  %225 = vset.pattern.permute.xlu0 0
  %226 = vperm.xlu0 %225, %v36
  %v227 = vpop.permute.xlu0 %226
  %230 = vset.pattern.permute.xlu0 0
  %231 = vperm.xlu0 %230, %v37
  %v232 = vpop.permute.xlu0 %231
  %235 = vset.pattern.permute.xlu0 0
  %236 = vperm.xlu0 %235, %v38
  %v237 = vpop.permute.xlu0 %236
  %240 = vset.pattern.permute.xlu0 0
  %241 = vperm.xlu0 %240, %v39
  %v242 = vpop.permute.xlu0 %241
  %245 = vset.pattern.permute.xlu0 0
  %246 = vperm.xlu0 %245, %v40
  %v247 = vpop.permute.xlu0 %246
  %250 = vset.pattern.permute.xlu0 0
  %251 = vperm.xlu0 %250, %v41
  %v252 = vpop.permute.xlu0 %251
  %255 = vset.pattern.permute.xlu0 0
  %256 = vperm.xlu0 %255, %v42
  %v257 = vpop.permute.xlu0 %256
  %260 = vset.pattern.permute.xlu0 0
  %261 = vperm.xlu0 %260, %v43
  %v262 = vpop.permute.xlu0 %261
  %265 = vset.pattern.permute.xlu0 0
  %266 = vperm.xlu0 %265, %v44
  %v267 = vpop.permute.xlu0 %266
  %270 = vset.pattern.permute.xlu0 0
  %271 = vperm.xlu0 %270, %v45
  %v272 = vpop.permute.xlu0 %271
  %275 = vset.pattern.permute.xlu0 0
  %276 = vperm.xlu0 %275, %v46
  %v277 = vpop.permute.xlu0 %276
  %280 = vset.pattern.permute.xlu0 0
  %281 = vperm.xlu0 %280, %v47
  %v282 = vpop.permute.xlu0 %281
  %285 = vset.pattern.permute.xlu0 0
  %286 = vperm.xlu0 %285, %v48
  %v287 = vpop.permute.xlu0 %286
  %290 = vset.pattern.permute.xlu0 0
  %291 = vperm.xlu0 %290, %v49
  %v292 = vpop.permute.xlu0 %291
  %295 = vset.pattern.permute.xlu0 0
  %296 = vperm.xlu0 %295, %v50
  %v297 = vpop.permute.xlu0 %296
  %300 = vset.pattern.permute.xlu0 0
  %301 = vperm.xlu0 %300, %v51
  %v302 = vpop.permute.xlu0 %301
  %305 = vset.pattern.permute.xlu0 0
  %306 = vperm.xlu0 %305, %v52
  %v307 = vpop.permute.xlu0 %306
  %310 = vset.pattern.permute.xlu0 0
  %311 = vperm.xlu0 %310, %v53
  %v312 = vpop.permute.xlu0 %311
  %315 = vset.pattern.permute.xlu0 0
  %316 = vperm.xlu0 %315, %v54
  %v317 = vpop.permute.xlu0 %316
  %320 = vset.pattern.permute.xlu0 0
  %321 = vperm.xlu0 %320, %v55
  %v322 = vpop.permute.xlu0 %321
  %325 = vset.pattern.permute.xlu0 0
  %326 = vperm.xlu0 %325, %v56
  %v327 = vpop.permute.xlu0 %326
  %330 = vset.pattern.permute.xlu0 0
  %331 = vperm.xlu0 %330, %v57
  %v332 = vpop.permute.xlu0 %331
  %335 = vset.pattern.permute.xlu0 0
  %336 = vperm.xlu0 %335, %v58
  %v337 = vpop.permute.xlu0 %336
  %340 = vset.pattern.permute.xlu0 0
  %341 = vperm.xlu0 %340, %v59
  %v342 = vpop.permute.xlu0 %341
  %345 = vset.pattern.permute.xlu0 0
  %346 = vperm.xlu0 %345, %v60
  %v347 = vpop.permute.xlu0 %346
  %350 = vset.pattern.permute.xlu0 0
  %351 = vperm.xlu0 %350, %v61
  %v352 = vpop.permute.xlu0 %351
  %355 = vset.pattern.permute.xlu0 0
  %356 = vperm.xlu0 %355, %v62
  %v357 = vpop.permute.xlu0 %356
  %360 = vset.pattern.permute.xlu0 0
  %361 = vperm.xlu0 %360, %v63
  %v362 = vpop.permute.xlu0 %361
  %365 = vset.pattern.permute.xlu0 0
  %366 = vperm.xlu0 %365, %v64
  %v367 = vpop.permute.xlu0 %366
  %370 = vset.pattern.permute.xlu0 0
  %371 = vperm.xlu0 %370, %v65
  %v372 = vpop.permute.xlu0 %371
  %375 = vset.pattern.permute.xlu0 0
  %376 = vperm.xlu0 %375, %v66
  %v377 = vpop.permute.xlu0 %376
  %380 = vset.pattern.permute.xlu0 0
  %381 = vperm.xlu0 %380, %v67
  %v382 = vpop.permute.xlu0 %381
  %385 = vset.pattern.permute.xlu0 0
  %386 = vperm.xlu0 %385, %v68
  %v387 = vpop.permute.xlu0 %386
  %390 = vset.pattern.permute.xlu0 0
  %391 = vperm.xlu0 %390, %v69
  %v392 = vpop.permute.xlu0 %391
  %395 = vset.pattern.permute.xlu0 0
  %396 = vperm.xlu0 %395, %v70
  %v397 = vpop.permute.xlu0 %396
  %400 = vset.pattern.permute.xlu0 0
  %401 = vperm.xlu0 %400, %v71
  %v402 = vpop.permute.xlu0 %401
  %405 = vset.pattern.permute.xlu0 0
  %406 = vperm.xlu0 %405, %v72
  %v407 = vpop.permute.xlu0 %406
  %410 = vset.pattern.permute.xlu0 0
  %411 = vperm.xlu0 %410, %v73
  %v412 = vpop.permute.xlu0 %411
  %415 = vset.pattern.permute.xlu0 0
  %416 = vperm.xlu0 %415, %v74
  %v417 = vpop.permute.xlu0 %416
  %420 = vset.pattern.permute.xlu0 0
  %421 = vperm.xlu0 %420, %v75
  %v422 = vpop.permute.xlu0 %421
  %425 = vset.pattern.permute.xlu0 0
  %426 = vperm.xlu0 %425, %v76
  %v427 = vpop.permute.xlu0 %426
  %430 = vset.pattern.permute.xlu0 0
  %431 = vperm.xlu0 %430, %v77
  %v432 = vpop.permute.xlu0 %431
  %435 = vset.pattern.permute.xlu0 0
  %436 = vperm.xlu0 %435, %v78
  %v437 = vpop.permute.xlu0 %436
  %440 = vset.pattern.permute.xlu0 0
  %441 = vperm.xlu0 %440, %v79
  %v442 = vpop.permute.xlu0 %441
  %445 = vset.pattern.permute.xlu0 0
  %446 = vperm.xlu0 %445, %v80
  %v447 = vpop.permute.xlu0 %446
  %450 = vset.pattern.permute.xlu0 0
  %451 = vperm.xlu0 %450, %v81
  %v452 = vpop.permute.xlu0 %451
  %455 = vset.pattern.permute.xlu0 0
  %456 = vperm.xlu0 %455, %v82
  %v457 = vpop.permute.xlu0 %456
  %460 = vset.pattern.permute.xlu0 0
  %461 = vperm.xlu0 %460, %v83
  %v462 = vpop.permute.xlu0 %461
  %465 = vset.pattern.permute.xlu0 0
  %466 = vperm.xlu0 %465, %v84
  %v467 = vpop.permute.xlu0 %466
  %470 = vset.pattern.permute.xlu0 0
  %471 = vperm.xlu0 %470, %v85
  %v472 = vpop.permute.xlu0 %471
  %475 = vset.pattern.permute.xlu0 0
  %476 = vperm.xlu0 %475, %v86
  %v477 = vpop.permute.xlu0 %476
  %480 = vset.pattern.permute.xlu0 0
  %481 = vperm.xlu0 %480, %v87
  %v482 = vpop.permute.xlu0 %481
  %485 = vset.pattern.permute.xlu0 0
  %486 = vperm.xlu0 %485, %v88
  %v487 = vpop.permute.xlu0 %486
  %490 = vset.pattern.permute.xlu0 0
  %491 = vperm.xlu0 %490, %v89
  %v492 = vpop.permute.xlu0 %491
  %495 = vset.pattern.permute.xlu0 0
  %496 = vperm.xlu0 %495, %v90
  %v497 = vpop.permute.xlu0 %496
  %500 = vset.pattern.permute.xlu0 0
  %501 = vperm.xlu0 %500, %v91
  %v502 = vpop.permute.xlu0 %501
  %505 = vset.pattern.permute.xlu0 0
  %506 = vperm.xlu0 %505, %v92
  %v507 = vpop.permute.xlu0 %506
  %510 = vset.pattern.permute.xlu0 0
  %511 = vperm.xlu0 %510, %v93
  %v512 = vpop.permute.xlu0 %511
  %515 = vset.pattern.permute.xlu0 0
  %516 = vperm.xlu0 %515, %v94
  %v517 = vpop.permute.xlu0 %516
  %520 = vset.pattern.permute.xlu0 0
  %521 = vperm.xlu0 %520, %v95
  %v522 = vpop.permute.xlu0 %521
  %525 = vset.pattern.permute.xlu0 0
  %526 = vperm.xlu0 %525, %v96
  %v527 = vpop.permute.xlu0 %526
  %530 = vset.pattern.permute.xlu0 0
  %531 = vperm.xlu0 %530, %v97
  %v532 = vpop.permute.xlu0 %531
  %535 = vset.pattern.permute.xlu0 0
  %536 = vperm.xlu0 %535, %v98
  %v537 = vpop.permute.xlu0 %536
  %540 = vset.pattern.permute.xlu0 0
  %541 = vperm.xlu0 %540, %v99
  %v542 = vpop.permute.xlu0 %541
  %545 = vset.pattern.permute.xlu0 0
  %546 = vperm.xlu0 %545, %v100
  %v547 = vpop.permute.xlu0 %546
  %550 = vset.pattern.permute.xlu0 0
  %551 = vperm.xlu0 %550, %v101
  %v552 = vpop.permute.xlu0 %551
  %555 = vset.pattern.permute.xlu0 0
  %556 = vperm.xlu0 %555, %v102
  %v557 = vpop.permute.xlu0 %556
  %560 = vset.pattern.permute.xlu0 0
  %561 = vperm.xlu0 %560, %v103
  %v562 = vpop.permute.xlu0 %561
  %565 = vset.pattern.permute.xlu0 0
  %566 = vperm.xlu0 %565, %v104
  %v567 = vpop.permute.xlu0 %566
  %570 = vset.pattern.permute.xlu0 0
  %571 = vperm.xlu0 %570, %v105
  %v572 = vpop.permute.xlu0 %571
  %575 = vset.pattern.permute.xlu0 0
  %576 = vperm.xlu0 %575, %v106
  %v577 = vpop.permute.xlu0 %576
  %580 = vset.pattern.permute.xlu0 0
  %581 = vperm.xlu0 %580, %v107
  %v582 = vpop.permute.xlu0 %581
  %585 = vset.pattern.permute.xlu0 0
  %586 = vperm.xlu0 %585, %v108
  %v587 = vpop.permute.xlu0 %586
  %590 = vset.pattern.permute.xlu0 0
  %591 = vperm.xlu0 %590, %v109
  %v592 = vpop.permute.xlu0 %591
  %595 = vset.pattern.permute.xlu0 0
  %596 = vperm.xlu0 %595, %v110
  %v597 = vpop.permute.xlu0 %596
  %600 = vset.pattern.permute.xlu0 0
  %601 = vperm.xlu0 %600, %v111
  %v602 = vpop.permute.xlu0 %601
  %605 = vset.pattern.permute.xlu0 0
  %606 = vperm.xlu0 %605, %v112
  %v607 = vpop.permute.xlu0 %606
  %610 = vset.pattern.permute.xlu0 0
  %611 = vperm.xlu0 %610, %v113
  %v612 = vpop.permute.xlu0 %611
  %615 = vset.pattern.permute.xlu0 0
  %616 = vperm.xlu0 %615, %v114
  %v617 = vpop.permute.xlu0 %616
  %620 = vset.pattern.permute.xlu0 0
  %621 = vperm.xlu0 %620, %v115
  %v622 = vpop.permute.xlu0 %621
  %625 = vset.pattern.permute.xlu0 0
  %626 = vperm.xlu0 %625, %v116
  %v627 = vpop.permute.xlu0 %626
  %630 = vset.pattern.permute.xlu0 0
  %631 = vperm.xlu0 %630, %v117
  %v632 = vpop.permute.xlu0 %631
  %635 = vset.pattern.permute.xlu0 0
  %636 = vperm.xlu0 %635, %v118
  %v637 = vpop.permute.xlu0 %636
  %640 = vset.pattern.permute.xlu0 0
  %641 = vperm.xlu0 %640, %v119
  %v642 = vpop.permute.xlu0 %641
  %645 = vset.pattern.permute.xlu0 0
  %646 = vperm.xlu0 %645, %v120
  %v647 = vpop.permute.xlu0 %646
  %650 = vset.pattern.permute.xlu0 0
  %651 = vperm.xlu0 %650, %v121
  %v652 = vpop.permute.xlu0 %651
  %655 = vset.pattern.permute.xlu0 0
  %656 = vperm.xlu0 %655, %v122
  %v657 = vpop.permute.xlu0 %656
  %660 = vset.pattern.permute.xlu0 0
  %661 = vperm.xlu0 %660, %v123
  %v662 = vpop.permute.xlu0 %661
  %665 = vset.pattern.permute.xlu0 0
  %666 = vperm.xlu0 %665, %v124
  %v667 = vpop.permute.xlu0 %666
  %670 = vset.pattern.permute.xlu0 0
  %671 = vperm.xlu0 %670, %v125
  %v672 = vpop.permute.xlu0 %671
  %675 = vset.pattern.permute.xlu0 0
  %676 = vperm.xlu0 %675, %v126
  %v677 = vpop.permute.xlu0 %676
  %680 = vset.pattern.permute.xlu0 0
  %681 = vperm.xlu0 %680, %v127
  %v682 = vpop.permute.xlu0 %681
  %685 = vset.pattern.permute.xlu0 0
  %686 = vperm.xlu0 %685, %v128
  %v687 = vpop.permute.xlu0 %686
  %690 = vset.pattern.permute.xlu0 0
  %691 = vperm.xlu0 %690, %v129
  %v692 = vpop.permute.xlu0 %691
  %695 = vset.pattern.permute.xlu0 0
  %696 = vperm.xlu0 %695, %v130
  %v697 = vpop.permute.xlu0 %696
  %700 = vset.pattern.permute.xlu0 0
  %701 = vperm.xlu0 %700, %v131
  %v702 = vpop.permute.xlu0 %701
  %705 = vset.pattern.permute.xlu0 0
  %706 = vperm.xlu0 %705, %v132
  %v707 = vpop.permute.xlu0 %706
  %710 = vset.pattern.permute.xlu0 0
  %711 = vperm.xlu0 %710, %v133
  %v712 = vpop.permute.xlu0 %711
  %715 = vset.pattern.permute.xlu0 0
  %716 = vperm.xlu0 %715, %v134
  %v717 = vpop.permute.xlu0 %716
  %720 = vset.pattern.permute.xlu0 0
  %721 = vperm.xlu0 %720, %v135
  %v722 = vpop.permute.xlu0 %721
  %725 = vset.pattern.permute.xlu0 0
  %726 = vperm.xlu0 %725, %v136
  %v727 = vpop.permute.xlu0 %726
  %730 = vset.pattern.permute.xlu0 0
  %731 = vperm.xlu0 %730, %v137
  %v732 = vpop.permute.xlu0 %731
  %735 = vset.pattern.permute.xlu0 0
  %736 = vperm.xlu0 %735, %v138
  %v737 = vpop.permute.xlu0 %736
  %740 = vset.pattern.permute.xlu0 0
  %741 = vperm.xlu0 %740, %v139
  %v742 = vpop.permute.xlu0 %741
  %745 = vset.pattern.permute.xlu0 0
  %746 = vperm.xlu0 %745, %v140
  %v747 = vpop.permute.xlu0 %746
  %750 = vset.pattern.permute.xlu0 0
  %751 = vperm.xlu0 %750, %v141
  %v752 = vpop.permute.xlu0 %751
  %755 = vset.pattern.permute.xlu0 0
  %756 = vperm.xlu0 %755, %v142
  %v757 = vpop.permute.xlu0 %756
  %760 = vset.pattern.permute.xlu0 0
  %761 = vperm.xlu0 %760, %v143
  %v762 = vpop.permute.xlu0 %761
  %765 = vset.pattern.permute.xlu0 0
  %766 = vperm.xlu0 %765, %v144
  %v767 = vpop.permute.xlu0 %766
  %770 = vset.pattern.permute.xlu0 0
  %771 = vperm.xlu0 %770, %v145
  %v772 = vpop.permute.xlu0 %771
  %v775 = vlaneseq
  %v776 = vshrl.u32 %v775, 7
  %v777 = vsub.s32 0, %v776
  %v778 = vrot.slane %v146, %v777
  %v780 = vsub.f32 %v152, %v778
  %v781 = vsub.f32 %v157, %v778
  %v782 = vsub.f32 %v162, %v778
  %v783 = vsub.f32 %v167, %v778
  %v784 = vsub.f32 %v172, %v778
  %v785 = vsub.f32 %v177, %v778
  %v786 = vsub.f32 %v182, %v778
  %v787 = vsub.f32 %v187, %v778
  %v788 = vsub.f32 %v192, %v778
  %v789 = vsub.f32 %v197, %v778
  %v790 = vsub.f32 %v202, %v778
  %v791 = vsub.f32 %v207, %v778
  %v792 = vsub.f32 %v212, %v778
  %v793 = vsub.f32 %v217, %v778
  %v794 = vsub.f32 %v222, %v778
  %v795 = vsub.f32 %v227, %v778
  %v796 = vsub.f32 %v232, %v778
  %v797 = vsub.f32 %v237, %v778
  %v798 = vsub.f32 %v242, %v778
  %v799 = vsub.f32 %v247, %v778
  %v800 = vsub.f32 %v252, %v778
  %v801 = vsub.f32 %v257, %v778
  %v802 = vsub.f32 %v262, %v778
  %v803 = vsub.f32 %v267, %v778
  %v804 = vsub.f32 %v272, %v778
  %v805 = vsub.f32 %v277, %v778
  %v806 = vsub.f32 %v282, %v778
  %v807 = vsub.f32 %v287, %v778
  %v808 = vsub.f32 %v292, %v778
  %v809 = vsub.f32 %v297, %v778
  %v810 = vsub.f32 %v302, %v778
  %v811 = vsub.f32 %v307, %v778
  %v812 = vsub.f32 %v312, %v778
  %v813 = vsub.f32 %v317, %v778
  %v814 = vsub.f32 %v322, %v778
  %v815 = vsub.f32 %v327, %v778
  %v816 = vsub.f32 %v332, %v778
  %v817 = vsub.f32 %v337, %v778
  %v818 = vsub.f32 %v342, %v778
  %v819 = vsub.f32 %v347, %v778
  %v820 = vsub.f32 %v352, %v778
  %v821 = vsub.f32 %v357, %v778
  %v822 = vsub.f32 %v362, %v778
  %v823 = vsub.f32 %v367, %v778
  %v824 = vsub.f32 %v372, %v778
  %v825 = vsub.f32 %v377, %v778
  %v826 = vsub.f32 %v382, %v778
  %v827 = vsub.f32 %v387, %v778
  %v828 = vsub.f32 %v392, %v778
  %v829 = vsub.f32 %v397, %v778
  %v830 = vsub.f32 %v402, %v778
  %v831 = vsub.f32 %v407, %v778
  %v832 = vsub.f32 %v412, %v778
  %v833 = vsub.f32 %v417, %v778
  %v834 = vsub.f32 %v422, %v778
  %v835 = vsub.f32 %v427, %v778
  %v836 = vsub.f32 %v432, %v778
  %v837 = vsub.f32 %v437, %v778
  %v838 = vsub.f32 %v442, %v778
  %v839 = vsub.f32 %v447, %v778
  %v840 = vsub.f32 %v452, %v778
  %v841 = vsub.f32 %v457, %v778
  %v842 = vsub.f32 %v462, %v778
  %v843 = vsub.f32 %v467, %v778
  %v844 = vsub.f32 %v472, %v778
  %v845 = vsub.f32 %v477, %v778
  %v846 = vsub.f32 %v482, %v778
  %v847 = vsub.f32 %v487, %v778
  %v848 = vsub.f32 %v492, %v778
  %v849 = vsub.f32 %v497, %v778
  %v850 = vsub.f32 %v502, %v778
  %v851 = vsub.f32 %v507, %v778
  %v852 = vsub.f32 %v512, %v778
  %v853 = vsub.f32 %v517, %v778
  %v854 = vsub.f32 %v522, %v778
  %v855 = vsub.f32 %v527, %v778
  %v856 = vsub.f32 %v532, %v778
  %v857 = vsub.f32 %v537, %v778
  %v858 = vsub.f32 %v542, %v778
  %v859 = vsub.f32 %v547, %v778
  %v860 = vsub.f32 %v552, %v778
  %v861 = vsub.f32 %v557, %v778
  %v862 = vsub.f32 %v562, %v778
  %v863 = vsub.f32 %v567, %v778
  %v864 = vsub.f32 %v572, %v778
  %v865 = vsub.f32 %v577, %v778
  %v866 = vsub.f32 %v582, %v778
  %v867 = vsub.f32 %v587, %v778
  %v868 = vsub.f32 %v592, %v778
  %v869 = vsub.f32 %v597, %v778
  %v870 = vsub.f32 %v602, %v778
  %v871 = vsub.f32 %v607, %v778
  %v872 = vsub.f32 %v612, %v778
  %v873 = vsub.f32 %v617, %v778
  %v874 = vsub.f32 %v622, %v778
  %v875 = vsub.f32 %v627, %v778
  %v876 = vsub.f32 %v632, %v778
  %v877 = vsub.f32 %v637, %v778
  %v878 = vsub.f32 %v642, %v778
  %v879 = vsub.f32 %v647, %v778
  %v880 = vsub.f32 %v652, %v778
  %v881 = vsub.f32 %v657, %v778
  %v882 = vsub.f32 %v662, %v778
  %v883 = vsub.f32 %v667, %v778
  %v884 = vsub.f32 %v672, %v778
  %v885 = vsub.f32 %v677, %v778
  %v886 = vsub.f32 %v682, %v778
  %v887 = vsub.f32 %v687, %v778
  %v888 = vsub.f32 %v692, %v778
  %v889 = vsub.f32 %v697, %v778
  %v890 = vsub.f32 %v702, %v778
  %v891 = vsub.f32 %v707, %v778
  %v892 = vsub.f32 %v712, %v778
  %v893 = vsub.f32 %v717, %v778
  %v894 = vsub.f32 %v722, %v778
  %v895 = vsub.f32 %v727, %v778
  %v896 = vsub.f32 %v732, %v778
  %v897 = vsub.f32 %v737, %v778
  %v898 = vsub.f32 %v742, %v778
  %v899 = vsub.f32 %v747, %v778
  %v900 = vsub.f32 %v752, %v778
  %v901 = vsub.f32 %v757, %v778
  %v902 = vsub.f32 %v762, %v778
  %v903 = vsub.f32 %v767, %v778
  %v904 = vsub.f32 %v772, %v778
  %v905 = vmul.f32 %v780, %v780
  %v906 = vmul.f32 %v781, %v781
  %v907 = vmul.f32 %v782, %v782
  %v908 = vmul.f32 %v783, %v783
  %v909 = vmul.f32 %v784, %v784
  %v910 = vmul.f32 %v785, %v785
  %v911 = vmul.f32 %v786, %v786
  %v912 = vmul.f32 %v787, %v787
  %v913 = vmul.f32 %v788, %v788
  %v914 = vmul.f32 %v789, %v789
  %v915 = vmul.f32 %v790, %v790
  %v916 = vmul.f32 %v791, %v791
  %v917 = vmul.f32 %v792, %v792
  %v918 = vmul.f32 %v793, %v793
  %v919 = vmul.f32 %v794, %v794
  %v920 = vmul.f32 %v795, %v795
  %v921 = vmul.f32 %v796, %v796
  %v922 = vmul.f32 %v797, %v797
  %v923 = vmul.f32 %v798, %v798
  %v924 = vmul.f32 %v799, %v799
  %v925 = vmul.f32 %v800, %v800
  %v926 = vmul.f32 %v801, %v801
  %v927 = vmul.f32 %v802, %v802
  %v928 = vmul.f32 %v803, %v803
  %v929 = vmul.f32 %v804, %v804
  %v930 = vmul.f32 %v805, %v805
  %v931 = vmul.f32 %v806, %v806
  %v932 = vmul.f32 %v807, %v807
  %v933 = vmul.f32 %v808, %v808
  %v934 = vmul.f32 %v809, %v809
  %v935 = vmul.f32 %v810, %v810
  %v936 = vmul.f32 %v811, %v811
  %v937 = vmul.f32 %v812, %v812
  %v938 = vmul.f32 %v813, %v813
  %v939 = vmul.f32 %v814, %v814
  %v940 = vmul.f32 %v815, %v815
  %v941 = vmul.f32 %v816, %v816
  %v942 = vmul.f32 %v817, %v817
  %v943 = vmul.f32 %v818, %v818
  %v944 = vmul.f32 %v819, %v819
  %v945 = vmul.f32 %v820, %v820
  %v946 = vmul.f32 %v821, %v821
  %v947 = vmul.f32 %v822, %v822
  %v948 = vmul.f32 %v823, %v823
  %v949 = vmul.f32 %v824, %v824
  %v950 = vmul.f32 %v825, %v825
  %v951 = vmul.f32 %v826, %v826
  %v952 = vmul.f32 %v827, %v827
  %v953 = vmul.f32 %v828, %v828
  %v954 = vmul.f32 %v829, %v829
  %v955 = vmul.f32 %v830, %v830
  %v956 = vmul.f32 %v831, %v831
  %v957 = vmul.f32 %v832, %v832
  %v958 = vmul.f32 %v833, %v833
  %v959 = vmul.f32 %v834, %v834
  %v960 = vmul.f32 %v835, %v835
  %v961 = vmul.f32 %v836, %v836
  %v962 = vmul.f32 %v837, %v837
  %v963 = vmul.f32 %v838, %v838
  %v964 = vmul.f32 %v839, %v839
  %v965 = vmul.f32 %v840, %v840
  %v966 = vmul.f32 %v841, %v841
  %v967 = vmul.f32 %v842, %v842
  %v968 = vmul.f32 %v843, %v843
  %v969 = vmul.f32 %v844, %v844
  %v970 = vmul.f32 %v845, %v845
  %v971 = vmul.f32 %v846, %v846
  %v972 = vmul.f32 %v847, %v847
  %v973 = vmul.f32 %v848, %v848
  %v974 = vmul.f32 %v849, %v849
  %v975 = vmul.f32 %v850, %v850
  %v976 = vmul.f32 %v851, %v851
  %v977 = vmul.f32 %v852, %v852
  %v978 = vmul.f32 %v853, %v853
  %v979 = vmul.f32 %v854, %v854
  %v980 = vmul.f32 %v855, %v855
  %v981 = vmul.f32 %v856, %v856
  %v982 = vmul.f32 %v857, %v857
  %v983 = vmul.f32 %v858, %v858
  %v984 = vmul.f32 %v859, %v859
  %v985 = vmul.f32 %v860, %v860
  %v986 = vmul.f32 %v861, %v861
  %v987 = vmul.f32 %v862, %v862
  %v988 = vmul.f32 %v863, %v863
  %v989 = vmul.f32 %v864, %v864
  %v990 = vmul.f32 %v865, %v865
  %v991 = vmul.f32 %v866, %v866
  %v992 = vmul.f32 %v867, %v867
  %v993 = vmul.f32 %v868, %v868
  %v994 = vmul.f32 %v869, %v869
  %v995 = vmul.f32 %v870, %v870
  %v996 = vmul.f32 %v871, %v871
  %v997 = vmul.f32 %v872, %v872
  %v998 = vmul.f32 %v873, %v873
  %v999 = vmul.f32 %v874, %v874
  %v1000 = vmul.f32 %v875, %v875
  %v1001 = vmul.f32 %v876, %v876
  %v1002 = vmul.f32 %v877, %v877
  %v1003 = vmul.f32 %v878, %v878
  %v1004 = vmul.f32 %v879, %v879
  %v1005 = vmul.f32 %v880, %v880
  %v1006 = vmul.f32 %v881, %v881
  %v1007 = vmul.f32 %v882, %v882
  %v1008 = vmul.f32 %v883, %v883
  %v1009 = vmul.f32 %v884, %v884
  %v1010 = vmul.f32 %v885, %v885
  %v1011 = vmul.f32 %v886, %v886
  %v1012 = vmul.f32 %v887, %v887
  %v1013 = vmul.f32 %v888, %v888
  %v1014 = vmul.f32 %v889, %v889
  %v1015 = vmul.f32 %v890, %v890
  %v1016 = vmul.f32 %v891, %v891
  %v1017 = vmul.f32 %v892, %v892
  %v1018 = vmul.f32 %v893, %v893
  %v1019 = vmul.f32 %v894, %v894
  %v1020 = vmul.f32 %v895, %v895
  %v1021 = vmul.f32 %v896, %v896
  %v1022 = vmul.f32 %v897, %v897
  %v1023 = vmul.f32 %v898, %v898
  %v1024 = vmul.f32 %v899, %v899
  %v1025 = vmul.f32 %v900, %v900
  %v1026 = vmul.f32 %v901, %v901
  %v1027 = vmul.f32 %v902, %v902
  %v1028 = vmul.f32 %v903, %v903
  %v1029 = vmul.f32 %v904, %v904
  %v1030 = vadd.f32 %v905, 0.0
  %v1031 = vadd.f32 %v906, 0.0
  %v1032 = vadd.f32 %v907, 0.0
  %v1033 = vadd.f32 %v908, 0.0
  %v1034 = vadd.f32 %v909, 0.0
  %v1035 = vadd.f32 %v910, 0.0
  %v1036 = vadd.f32 %v911, 0.0
  %v1037 = vadd.f32 %v912, 0.0
  %v1038 = vadd.f32 %v913, 0.0
  %v1039 = vadd.f32 %v914, 0.0
  %v1040 = vadd.f32 %v915, 0.0
  %v1041 = vadd.f32 %v916, 0.0
  %v1042 = vadd.f32 %v917, 0.0
  %v1043 = vadd.f32 %v918, 0.0
  %v1044 = vadd.f32 %v919, 0.0
  %v1045 = vadd.f32 %v920, 0.0
  %v1046 = vadd.f32 %v921, 0.0
  %v1047 = vadd.f32 %v922, 0.0
  %v1048 = vadd.f32 %v923, 0.0
  %v1049 = vadd.f32 %v924, 0.0
  %v1050 = vadd.f32 %v925, 0.0
  %v1051 = vadd.f32 %v926, 0.0
  %v1052 = vadd.f32 %v927, 0.0
  %v1053 = vadd.f32 %v928, 0.0
  %v1054 = vadd.f32 %v929, 0.0
  %v1055 = vadd.f32 %v930, 0.0
  %v1056 = vadd.f32 %v931, 0.0
  %v1057 = vadd.f32 %v932, 0.0
  %v1058 = vadd.f32 %v933, 0.0
  %v1059 = vadd.f32 %v934, 0.0
  %v1060 = vadd.f32 %v935, 0.0
  %v1061 = vadd.f32 %v936, 0.0
  %v1062 = vadd.f32 %v937, 0.0
  %v1063 = vadd.f32 %v938, 0.0
  %v1064 = vadd.f32 %v939, 0.0
  %v1065 = vadd.f32 %v940, 0.0
  %v1066 = vadd.f32 %v941, 0.0
  %v1067 = vadd.f32 %v942, 0.0
  %v1068 = vadd.f32 %v943, 0.0
  %v1069 = vadd.f32 %v944, 0.0
  %v1070 = vadd.f32 %v945, 0.0
  %v1071 = vadd.f32 %v946, 0.0
  %v1072 = vadd.f32 %v947, 0.0
  %v1073 = vadd.f32 %v948, 0.0
  %v1074 = vadd.f32 %v949, 0.0
  %v1075 = vadd.f32 %v950, 0.0
  %v1076 = vadd.f32 %v951, 0.0
  %v1077 = vadd.f32 %v952, 0.0
  %v1078 = vadd.f32 %v953, 0.0
  %v1079 = vadd.f32 %v954, 0.0
  %v1080 = vadd.f32 %v955, 0.0
  %v1081 = vadd.f32 %v956, 0.0
  %v1082 = vadd.f32 %v957, 0.0
  %v1083 = vadd.f32 %v958, 0.0
  %v1084 = vadd.f32 %v959, 0.0
  %v1085 = vadd.f32 %v960, 0.0
  %v1086 = vadd.f32 %v961, 0.0
  %v1087 = vadd.f32 %v962, 0.0
  %v1088 = vadd.f32 %v963, 0.0
  %v1089 = vadd.f32 %v964, 0.0
  %v1090 = vadd.f32 %v965, 0.0
  %v1091 = vadd.f32 %v966, 0.0
  %v1092 = vadd.f32 %v967, 0.0
  %v1093 = vadd.f32 %v968, 0.0
  %v1094 = vadd.f32 %v969, 0.0
  %v1095 = vadd.f32 %v970, 0.0
  %v1096 = vadd.f32 %v971, 0.0
  %v1097 = vadd.f32 %v972, 0.0
  %v1098 = vadd.f32 %v973, 0.0
  %v1099 = vadd.f32 %v974, 0.0
  %v1100 = vadd.f32 %v975, 0.0
  %v1101 = vadd.f32 %v976, 0.0
  %v1102 = vadd.f32 %v977, 0.0
  %v1103 = vadd.f32 %v978, 0.0
  %v1104 = vadd.f32 %v979, 0.0
  %v1105 = vadd.f32 %v980, 0.0
  %v1106 = vadd.f32 %v981, 0.0
  %v1107 = vadd.f32 %v982, 0.0
  %v1108 = vadd.f32 %v983, 0.0
  %v1109 = vadd.f32 %v984, 0.0
  %v1110 = vadd.f32 %v985, 0.0
  %v1111 = vadd.f32 %v986, 0.0
  %v1112 = vadd.f32 %v987, 0.0
  %v1113 = vadd.f32 %v988, 0.0
  %v1114 = vadd.f32 %v989, 0.0
  %v1115 = vadd.f32 %v990, 0.0
  %v1116 = vadd.f32 %v991, 0.0
  %v1117 = vadd.f32 %v992, 0.0
  %v1118 = vadd.f32 %v993, 0.0
  %v1119 = vadd.f32 %v994, 0.0
  %v1120 = vadd.f32 %v995, 0.0
  %v1121 = vadd.f32 %v996, 0.0
  %v1122 = vadd.f32 %v997, 0.0
  %v1123 = vadd.f32 %v998, 0.0
  %v1124 = vadd.f32 %v999, 0.0
  %v1125 = vadd.f32 %v1000, 0.0
  %v1126 = vadd.f32 %v1001, 0.0
  %v1127 = vadd.f32 %v1002, 0.0
  %v1128 = vadd.f32 %v1003, 0.0
  %v1129 = vadd.f32 %v1004, 0.0
  %v1130 = vadd.f32 %v1005, 0.0
  %v1131 = vadd.f32 %v1006, 0.0
  %v1132 = vadd.f32 %v1007, 0.0
  %v1133 = vadd.f32 %v1008, 0.0
  %v1134 = vadd.f32 %v1009, 0.0
  %v1135 = vadd.f32 %v1010, 0.0
  %v1136 = vadd.f32 %v1011, 0.0
  %v1137 = vadd.f32 %v1012, 0.0
  %v1138 = vadd.f32 %v1013, 0.0
  %v1139 = vadd.f32 %v1014, 0.0
  %v1140 = vadd.f32 %v1015, 0.0
  %v1141 = vadd.f32 %v1016, 0.0
  %v1142 = vadd.f32 %v1017, 0.0
  %v1143 = vadd.f32 %v1018, 0.0
  %v1144 = vadd.f32 %v1019, 0.0
  %v1145 = vadd.f32 %v1020, 0.0
  %v1146 = vadd.f32 %v1021, 0.0
  %v1147 = vadd.f32 %v1022, 0.0
  %v1148 = vadd.f32 %v1023, 0.0
  %v1149 = vadd.f32 %v1024, 0.0
  %v1150 = vadd.f32 %v1025, 0.0
  %v1151 = vadd.f32 %v1026, 0.0
  %v1152 = vadd.f32 %v1027, 0.0
  %v1153 = vadd.f32 %v1028, 0.0
  %v1154 = vadd.f32 %v1029, 0.0
  %v1155 = vmul.f32 %v1030, -50.0
  %v1156 = vmul.f32 %v1031, -50.0
  %v1157 = vmul.f32 %v1032, -50.0
  %v1158 = vmul.f32 %v1033, -50.0
  %v1159 = vmul.f32 %v1034, -50.0
  %v1160 = vmul.f32 %v1035, -50.0
  %v1161 = vmul.f32 %v1036, -50.0
  %v1162 = vmul.f32 %v1037, -50.0
  %v1163 = vmul.f32 %v1038, -50.0
  %v1164 = vmul.f32 %v1039, -50.0
  %v1165 = vmul.f32 %v1040, -50.0
  %v1166 = vmul.f32 %v1041, -50.0
  %v1167 = vmul.f32 %v1042, -50.0
  %v1168 = vmul.f32 %v1043, -50.0
  %v1169 = vmul.f32 %v1044, -50.0
  %v1170 = vmul.f32 %v1045, -50.0
  %v1171 = vmul.f32 %v1046, -50.0
  %v1172 = vmul.f32 %v1047, -50.0
  %v1173 = vmul.f32 %v1048, -50.0
  %v1174 = vmul.f32 %v1049, -50.0
  %v1175 = vmul.f32 %v1050, -50.0
  %v1176 = vmul.f32 %v1051, -50.0
  %v1177 = vmul.f32 %v1052, -50.0
  %v1178 = vmul.f32 %v1053, -50.0
  %v1179 = vmul.f32 %v1054, -50.0
  %v1180 = vmul.f32 %v1055, -50.0
  %v1181 = vmul.f32 %v1056, -50.0
  %v1182 = vmul.f32 %v1057, -50.0
  %v1183 = vmul.f32 %v1058, -50.0
  %v1184 = vmul.f32 %v1059, -50.0
  %v1185 = vmul.f32 %v1060, -50.0
  %v1186 = vmul.f32 %v1061, -50.0
  %v1187 = vmul.f32 %v1062, -50.0
  %v1188 = vmul.f32 %v1063, -50.0
  %v1189 = vmul.f32 %v1064, -50.0
  %v1190 = vmul.f32 %v1065, -50.0
  %v1191 = vmul.f32 %v1066, -50.0
  %v1192 = vmul.f32 %v1067, -50.0
  %v1193 = vmul.f32 %v1068, -50.0
  %v1194 = vmul.f32 %v1069, -50.0
  %v1195 = vmul.f32 %v1070, -50.0
  %v1196 = vmul.f32 %v1071, -50.0
  %v1197 = vmul.f32 %v1072, -50.0
  %v1198 = vmul.f32 %v1073, -50.0
  %v1199 = vmul.f32 %v1074, -50.0
  %v1200 = vmul.f32 %v1075, -50.0
  %v1201 = vmul.f32 %v1076, -50.0
  %v1202 = vmul.f32 %v1077, -50.0
  %v1203 = vmul.f32 %v1078, -50.0
  %v1204 = vmul.f32 %v1079, -50.0
  %v1205 = vmul.f32 %v1080, -50.0
  %v1206 = vmul.f32 %v1081, -50.0
  %v1207 = vmul.f32 %v1082, -50.0
  %v1208 = vmul.f32 %v1083, -50.0
  %v1209 = vmul.f32 %v1084, -50.0
  %v1210 = vmul.f32 %v1085, -50.0
  %v1211 = vmul.f32 %v1086, -50.0
  %v1212 = vmul.f32 %v1087, -50.0
  %v1213 = vmul.f32 %v1088, -50.0
  %v1214 = vmul.f32 %v1089, -50.0
  %v1215 = vmul.f32 %v1090, -50.0
  %v1216 = vmul.f32 %v1091, -50.0
  %v1217 = vmul.f32 %v1092, -50.0
  %v1218 = vmul.f32 %v1093, -50.0
  %v1219 = vmul.f32 %v1094, -50.0
  %v1220 = vmul.f32 %v1095, -50.0
  %v1221 = vmul.f32 %v1096, -50.0
  %v1222 = vmul.f32 %v1097, -50.0
  %v1223 = vmul.f32 %v1098, -50.0
  %v1224 = vmul.f32 %v1099, -50.0
  %v1225 = vmul.f32 %v1100, -50.0
  %v1226 = vmul.f32 %v1101, -50.0
  %v1227 = vmul.f32 %v1102, -50.0
  %v1228 = vmul.f32 %v1103, -50.0
  %v1229 = vmul.f32 %v1104, -50.0
  %v1230 = vmul.f32 %v1105, -50.0
  %v1231 = vmul.f32 %v1106, -50.0
  %v1232 = vmul.f32 %v1107, -50.0
  %v1233 = vmul.f32 %v1108, -50.0
  %v1234 = vmul.f32 %v1109, -50.0
  %v1235 = vmul.f32 %v1110, -50.0
  %v1236 = vmul.f32 %v1111, -50.0
  %v1237 = vmul.f32 %v1112, -50.0
  %v1238 = vmul.f32 %v1113, -50.0
  %v1239 = vmul.f32 %v1114, -50.0
  %v1240 = vmul.f32 %v1115, -50.0
  %v1241 = vmul.f32 %v1116, -50.0
  %v1242 = vmul.f32 %v1117, -50.0
  %v1243 = vmul.f32 %v1118, -50.0
  %v1244 = vmul.f32 %v1119, -50.0
  %v1245 = vmul.f32 %v1120, -50.0
  %v1246 = vmul.f32 %v1121, -50.0
  %v1247 = vmul.f32 %v1122, -50.0
  %v1248 = vmul.f32 %v1123, -50.0
  %v1249 = vmul.f32 %v1124, -50.0
  %v1250 = vmul.f32 %v1125, -50.0
  %v1251 = vmul.f32 %v1126, -50.0
  %v1252 = vmul.f32 %v1127, -50.0
  %v1253 = vmul.f32 %v1128, -50.0
  %v1254 = vmul.f32 %v1129, -50.0
  %v1255 = vmul.f32 %v1130, -50.0
  %v1256 = vmul.f32 %v1131, -50.0
  %v1257 = vmul.f32 %v1132, -50.0
  %v1258 = vmul.f32 %v1133, -50.0
  %v1259 = vmul.f32 %v1134, -50.0
  %v1260 = vmul.f32 %v1135, -50.0
  %v1261 = vmul.f32 %v1136, -50.0
  %v1262 = vmul.f32 %v1137, -50.0
  %v1263 = vmul.f32 %v1138, -50.0
  %v1264 = vmul.f32 %v1139, -50.0
  %v1265 = vmul.f32 %v1140, -50.0
  %v1266 = vmul.f32 %v1141, -50.0
  %v1267 = vmul.f32 %v1142, -50.0
  %v1268 = vmul.f32 %v1143, -50.0
  %v1269 = vmul.f32 %v1144, -50.0
  %v1270 = vmul.f32 %v1145, -50.0
  %v1271 = vmul.f32 %v1146, -50.0
  %v1272 = vmul.f32 %v1147, -50.0
  %v1273 = vmul.f32 %v1148, -50.0
  %v1274 = vmul.f32 %v1149, -50.0
  %v1275 = vmul.f32 %v1150, -50.0
  %v1276 = vmul.f32 %v1151, -50.0
  %v1277 = vmul.f32 %v1152, -50.0
  %v1278 = vmul.f32 %v1153, -50.0
  %v1279 = vmul.f32 %v1154, -50.0
  %v1280 = vmul.f32 %v1155, 1.442695
  %v1281 = vpow.pop %v1280
  %v1282 = vmul.f32 %v1156, 1.442695
  %v1283 = vpow.pop %v1282
  %v1284 = vmul.f32 %v1157, 1.442695
  %v1285 = vpow.pop %v1284
  %v1286 = vmul.f32 %v1158, 1.442695
  %v1287 = vpow.pop %v1286
  %v1288 = vmul.f32 %v1159, 1.442695
  %v1289 = vpow.pop %v1288
  %v1290 = vmul.f32 %v1160, 1.442695
  %v1291 = vpow.pop %v1290
  %v1292 = vmul.f32 %v1161, 1.442695
  %v1293 = vpow.pop %v1292
  %v1294 = vmul.f32 %v1162, 1.442695
  %v1295 = vpow.pop %v1294
  %v1296 = vmul.f32 %v1163, 1.442695
  %v1297 = vpow.pop %v1296
  %v1298 = vmul.f32 %v1164, 1.442695
  %v1299 = vpow.pop %v1298
  %v1300 = vmul.f32 %v1165, 1.442695
  %v1301 = vpow.pop %v1300
  %v1302 = vmul.f32 %v1166, 1.442695
  %v1303 = vpow.pop %v1302
  %v1304 = vmul.f32 %v1167, 1.442695
  %v1305 = vpow.pop %v1304
  %v1306 = vmul.f32 %v1168, 1.442695
  %v1307 = vpow.pop %v1306
  %v1308 = vmul.f32 %v1169, 1.442695
  %v1309 = vpow.pop %v1308
  %v1310 = vmul.f32 %v1170, 1.442695
  %v1311 = vpow.pop %v1310
  %v1312 = vmul.f32 %v1171, 1.442695
  %v1313 = vpow.pop %v1312
  %v1314 = vmul.f32 %v1172, 1.442695
  %v1315 = vpow.pop %v1314
  %v1316 = vmul.f32 %v1173, 1.442695
  %v1317 = vpow.pop %v1316
  %v1318 = vmul.f32 %v1174, 1.442695
  %v1319 = vpow.pop %v1318
  %v1320 = vmul.f32 %v1175, 1.442695
  %v1321 = vpow.pop %v1320
  %v1322 = vmul.f32 %v1176, 1.442695
  %v1323 = vpow.pop %v1322
  %v1324 = vmul.f32 %v1177, 1.442695
  %v1325 = vpow.pop %v1324
  %v1326 = vmul.f32 %v1178, 1.442695
  %v1327 = vpow.pop %v1326
  %v1328 = vmul.f32 %v1179, 1.442695
  %v1329 = vpow.pop %v1328
  %v1330 = vmul.f32 %v1180, 1.442695
  %v1331 = vpow.pop %v1330
  %v1332 = vmul.f32 %v1181, 1.442695
  %v1333 = vpow.pop %v1332
  %v1334 = vmul.f32 %v1182, 1.442695
  %v1335 = vpow.pop %v1334
  %v1336 = vmul.f32 %v1183, 1.442695
  %v1337 = vpow.pop %v1336
  %v1338 = vmul.f32 %v1184, 1.442695
  %v1339 = vpow.pop %v1338
  %v1340 = vmul.f32 %v1185, 1.442695
  %v1341 = vpow.pop %v1340
  %v1342 = vmul.f32 %v1186, 1.442695
  %v1343 = vpow.pop %v1342
  %v1344 = vmul.f32 %v1187, 1.442695
  %v1345 = vpow.pop %v1344
  %v1346 = vmul.f32 %v1188, 1.442695
  %v1347 = vpow.pop %v1346
  %v1348 = vmul.f32 %v1189, 1.442695
  %v1349 = vpow.pop %v1348
  %v1350 = vmul.f32 %v1190, 1.442695
  %v1351 = vpow.pop %v1350
  %v1352 = vmul.f32 %v1191, 1.442695
  %v1353 = vpow.pop %v1352
  %v1354 = vmul.f32 %v1192, 1.442695
  %v1355 = vpow.pop %v1354
  %v1356 = vmul.f32 %v1193, 1.442695
  %v1357 = vpow.pop %v1356
  %v1358 = vmul.f32 %v1194, 1.442695
  %v1359 = vpow.pop %v1358
  %v1360 = vmul.f32 %v1195, 1.442695
  %v1361 = vpow.pop %v1360
  %v1362 = vmul.f32 %v1196, 1.442695
  %v1363 = vpow.pop %v1362
  %v1364 = vmul.f32 %v1197, 1.442695
  %v1365 = vpow.pop %v1364
  %v1366 = vmul.f32 %v1198, 1.442695
  %v1367 = vpow.pop %v1366
  %v1368 = vmul.f32 %v1199, 1.442695
  %v1369 = vpow.pop %v1368
  %v1370 = vmul.f32 %v1200, 1.442695
  %v1371 = vpow.pop %v1370
  %v1372 = vmul.f32 %v1201, 1.442695
  %v1373 = vpow.pop %v1372
  %v1374 = vmul.f32 %v1202, 1.442695
  %v1375 = vpow.pop %v1374
  %v1376 = vmul.f32 %v1203, 1.442695
  %v1377 = vpow.pop %v1376
  %v1378 = vmul.f32 %v1204, 1.442695
  %v1379 = vpow.pop %v1378
  %v1380 = vmul.f32 %v1205, 1.442695
  %v1381 = vpow.pop %v1380
  %v1382 = vmul.f32 %v1206, 1.442695
  %v1383 = vpow.pop %v1382
  %v1384 = vmul.f32 %v1207, 1.442695
  %v1385 = vpow.pop %v1384
  %v1386 = vmul.f32 %v1208, 1.442695
  %v1387 = vpow.pop %v1386
  %v1388 = vmul.f32 %v1209, 1.442695
  %v1389 = vpow.pop %v1388
  %v1390 = vmul.f32 %v1210, 1.442695
  %v1391 = vpow.pop %v1390
  %v1392 = vmul.f32 %v1211, 1.442695
  %v1393 = vpow.pop %v1392
  %v1394 = vmul.f32 %v1212, 1.442695
  %v1395 = vpow.pop %v1394
  %v1396 = vmul.f32 %v1213, 1.442695
  %v1397 = vpow.pop %v1396
  %v1398 = vmul.f32 %v1214, 1.442695
  %v1399 = vpow.pop %v1398
  %v1400 = vmul.f32 %v1215, 1.442695
  %v1401 = vpow.pop %v1400
  %v1402 = vmul.f32 %v1216, 1.442695
  %v1403 = vpow.pop %v1402
  %v1404 = vmul.f32 %v1217, 1.442695
  %v1405 = vpow.pop %v1404
  %v1406 = vmul.f32 %v1218, 1.442695
  %v1407 = vpow.pop %v1406
  %v1408 = vmul.f32 %v1219, 1.442695
  %v1409 = vpow.pop %v1408
  %v1410 = vmul.f32 %v1220, 1.442695
  %v1411 = vpow.pop %v1410
  %v1412 = vmul.f32 %v1221, 1.442695
  %v1413 = vpow.pop %v1412
  %v1414 = vmul.f32 %v1222, 1.442695
  %v1415 = vpow.pop %v1414
  %v1416 = vmul.f32 %v1223, 1.442695
  %v1417 = vpow.pop %v1416
  %v1418 = vmul.f32 %v1224, 1.442695
  %v1419 = vpow.pop %v1418
  %v1420 = vmul.f32 %v1225, 1.442695
  %v1421 = vpow.pop %v1420
  %v1422 = vmul.f32 %v1226, 1.442695
  %v1423 = vpow.pop %v1422
  %v1424 = vmul.f32 %v1227, 1.442695
  %v1425 = vpow.pop %v1424
  %v1426 = vmul.f32 %v1228, 1.442695
  %v1427 = vpow.pop %v1426
  %v1428 = vmul.f32 %v1229, 1.442695
  %v1429 = vpow.pop %v1428
  %v1430 = vmul.f32 %v1230, 1.442695
  %v1431 = vpow.pop %v1430
  %v1432 = vmul.f32 %v1231, 1.442695
  %v1433 = vpow.pop %v1432
  %v1434 = vmul.f32 %v1232, 1.442695
  %v1435 = vpow.pop %v1434
  %v1436 = vmul.f32 %v1233, 1.442695
  %v1437 = vpow.pop %v1436
  %v1438 = vmul.f32 %v1234, 1.442695
  %v1439 = vpow.pop %v1438
  %v1440 = vmul.f32 %v1235, 1.442695
  %v1441 = vpow.pop %v1440
  %v1442 = vmul.f32 %v1236, 1.442695
  %v1443 = vpow.pop %v1442
  %v1444 = vmul.f32 %v1237, 1.442695
  %v1445 = vpow.pop %v1444
  %v1446 = vmul.f32 %v1238, 1.442695
  %v1447 = vpow.pop %v1446
  %v1448 = vmul.f32 %v1239, 1.442695
  %v1449 = vpow.pop %v1448
  %v1450 = vmul.f32 %v1240, 1.442695
  %v1451 = vpow.pop %v1450
  %v1452 = vmul.f32 %v1241, 1.442695
  %v1453 = vpow.pop %v1452
  %v1454 = vmul.f32 %v1242, 1.442695
  %v1455 = vpow.pop %v1454
  %v1456 = vmul.f32 %v1243, 1.442695
  %v1457 = vpow.pop %v1456
  %v1458 = vmul.f32 %v1244, 1.442695
  %v1459 = vpow.pop %v1458
  %v1460 = vmul.f32 %v1245, 1.442695
  %v1461 = vpow.pop %v1460
  %v1462 = vmul.f32 %v1246, 1.442695
  %v1463 = vpow.pop %v1462
  %v1464 = vmul.f32 %v1247, 1.442695
  %v1465 = vpow.pop %v1464
  %v1466 = vmul.f32 %v1248, 1.442695
  %v1467 = vpow.pop %v1466
  %v1468 = vmul.f32 %v1249, 1.442695
  %v1469 = vpow.pop %v1468
  %v1470 = vmul.f32 %v1250, 1.442695
  %v1471 = vpow.pop %v1470
  %v1472 = vmul.f32 %v1251, 1.442695
  %v1473 = vpow.pop %v1472
  %v1474 = vmul.f32 %v1252, 1.442695
  %v1475 = vpow.pop %v1474
  %v1476 = vmul.f32 %v1253, 1.442695
  %v1477 = vpow.pop %v1476
  %v1478 = vmul.f32 %v1254, 1.442695
  %v1479 = vpow.pop %v1478
  %v1480 = vmul.f32 %v1255, 1.442695
  %v1481 = vpow.pop %v1480
  %v1482 = vmul.f32 %v1256, 1.442695
  %v1483 = vpow.pop %v1482
  %v1484 = vmul.f32 %v1257, 1.442695
  %v1485 = vpow.pop %v1484
  %v1486 = vmul.f32 %v1258, 1.442695
  %v1487 = vpow.pop %v1486
  %v1488 = vmul.f32 %v1259, 1.442695
  %v1489 = vpow.pop %v1488
  %v1490 = vmul.f32 %v1260, 1.442695
  %v1491 = vpow.pop %v1490
  %v1492 = vmul.f32 %v1261, 1.442695
  %v1493 = vpow.pop %v1492
  %v1494 = vmul.f32 %v1262, 1.442695
  %v1495 = vpow.pop %v1494
  %v1496 = vmul.f32 %v1263, 1.442695
  %v1497 = vpow.pop %v1496
  %v1498 = vmul.f32 %v1264, 1.442695
  %v1499 = vpow.pop %v1498
  %v1500 = vmul.f32 %v1265, 1.442695
  %v1501 = vpow.pop %v1500
  %v1502 = vmul.f32 %v1266, 1.442695
  %v1503 = vpow.pop %v1502
  %v1504 = vmul.f32 %v1267, 1.442695
  %v1505 = vpow.pop %v1504
  %v1506 = vmul.f32 %v1268, 1.442695
  %v1507 = vpow.pop %v1506
  %v1508 = vmul.f32 %v1269, 1.442695
  %v1509 = vpow.pop %v1508
  %v1510 = vmul.f32 %v1270, 1.442695
  %v1511 = vpow.pop %v1510
  %v1512 = vmul.f32 %v1271, 1.442695
  %v1513 = vpow.pop %v1512
  %v1514 = vmul.f32 %v1272, 1.442695
  %v1515 = vpow.pop %v1514
  %v1516 = vmul.f32 %v1273, 1.442695
  %v1517 = vpow.pop %v1516
  %v1518 = vmul.f32 %v1274, 1.442695
  %v1519 = vpow.pop %v1518
  %v1520 = vmul.f32 %v1275, 1.442695
  %v1521 = vpow.pop %v1520
  %v1522 = vmul.f32 %v1276, 1.442695
  %v1523 = vpow.pop %v1522
  %v1524 = vmul.f32 %v1277, 1.442695
  %v1525 = vpow.pop %v1524
  %v1526 = vmul.f32 %v1278, 1.442695
  %v1527 = vpow.pop %v1526
  %v1528 = vmul.f32 %v1279, 1.442695
  %v1529 = vpow.pop %v1528
  %v1531 = vlaneseq
  %v1532 = vshrl.u32 %v1531, 7
  %v1533 = vsub.s32 0, %v1532
  %v1534 = vrot.slane %v147, %v1533
  %v1536 = vmul.f32 %v1281, %v1534
  %v1537 = vmul.f32 %v1283, %v1534
  %v1538 = vmul.f32 %v1285, %v1534
  %v1539 = vmul.f32 %v1287, %v1534
  %v1540 = vmul.f32 %v1289, %v1534
  %v1541 = vmul.f32 %v1291, %v1534
  %v1542 = vmul.f32 %v1293, %v1534
  %v1543 = vmul.f32 %v1295, %v1534
  %v1544 = vmul.f32 %v1297, %v1534
  %v1545 = vmul.f32 %v1299, %v1534
  %v1546 = vmul.f32 %v1301, %v1534
  %v1547 = vmul.f32 %v1303, %v1534
  %v1548 = vmul.f32 %v1305, %v1534
  %v1549 = vmul.f32 %v1307, %v1534
  %v1550 = vmul.f32 %v1309, %v1534
  %v1551 = vmul.f32 %v1311, %v1534
  %v1552 = vmul.f32 %v1313, %v1534
  %v1553 = vmul.f32 %v1315, %v1534
  %v1554 = vmul.f32 %v1317, %v1534
  %v1555 = vmul.f32 %v1319, %v1534
  %v1556 = vmul.f32 %v1321, %v1534
  %v1557 = vmul.f32 %v1323, %v1534
  %v1558 = vmul.f32 %v1325, %v1534
  %v1559 = vmul.f32 %v1327, %v1534
  %v1560 = vmul.f32 %v1329, %v1534
  %v1561 = vmul.f32 %v1331, %v1534
  %v1562 = vmul.f32 %v1333, %v1534
  %v1563 = vmul.f32 %v1335, %v1534
  %v1564 = vmul.f32 %v1337, %v1534
  %v1565 = vmul.f32 %v1339, %v1534
  %v1566 = vmul.f32 %v1341, %v1534
  %v1567 = vmul.f32 %v1343, %v1534
  %v1568 = vmul.f32 %v1345, %v1534
  %v1569 = vmul.f32 %v1347, %v1534
  %v1570 = vmul.f32 %v1349, %v1534
  %v1571 = vmul.f32 %v1351, %v1534
  %v1572 = vmul.f32 %v1353, %v1534
  %v1573 = vmul.f32 %v1355, %v1534
  %v1574 = vmul.f32 %v1357, %v1534
  %v1575 = vmul.f32 %v1359, %v1534
  %v1576 = vmul.f32 %v1361, %v1534
  %v1577 = vmul.f32 %v1363, %v1534
  %v1578 = vmul.f32 %v1365, %v1534
  %v1579 = vmul.f32 %v1367, %v1534
  %v1580 = vmul.f32 %v1369, %v1534
  %v1581 = vmul.f32 %v1371, %v1534
  %v1582 = vmul.f32 %v1373, %v1534
  %v1583 = vmul.f32 %v1375, %v1534
  %v1584 = vmul.f32 %v1377, %v1534
  %v1585 = vmul.f32 %v1379, %v1534
  %v1586 = vmul.f32 %v1381, %v1534
  %v1587 = vmul.f32 %v1383, %v1534
  %v1588 = vmul.f32 %v1385, %v1534
  %v1589 = vmul.f32 %v1387, %v1534
  %v1590 = vmul.f32 %v1389, %v1534
  %v1591 = vmul.f32 %v1391, %v1534
  %v1592 = vmul.f32 %v1393, %v1534
  %v1593 = vmul.f32 %v1395, %v1534
  %v1594 = vmul.f32 %v1397, %v1534
  %v1595 = vmul.f32 %v1399, %v1534
  %v1596 = vmul.f32 %v1401, %v1534
  %v1597 = vmul.f32 %v1403, %v1534
  %v1598 = vmul.f32 %v1405, %v1534
  %v1599 = vmul.f32 %v1407, %v1534
  %v1600 = vmul.f32 %v1409, %v1534
  %v1601 = vmul.f32 %v1411, %v1534
  %v1602 = vmul.f32 %v1413, %v1534
  %v1603 = vmul.f32 %v1415, %v1534
  %v1604 = vmul.f32 %v1417, %v1534
  %v1605 = vmul.f32 %v1419, %v1534
  %v1606 = vmul.f32 %v1421, %v1534
  %v1607 = vmul.f32 %v1423, %v1534
  %v1608 = vmul.f32 %v1425, %v1534
  %v1609 = vmul.f32 %v1427, %v1534
  %v1610 = vmul.f32 %v1429, %v1534
  %v1611 = vmul.f32 %v1431, %v1534
  %v1612 = vmul.f32 %v1433, %v1534
  %v1613 = vmul.f32 %v1435, %v1534
  %v1614 = vmul.f32 %v1437, %v1534
  %v1615 = vmul.f32 %v1439, %v1534
  %v1616 = vmul.f32 %v1441, %v1534
  %v1617 = vmul.f32 %v1443, %v1534
  %v1618 = vmul.f32 %v1445, %v1534
  %v1619 = vmul.f32 %v1447, %v1534
  %v1620 = vmul.f32 %v1449, %v1534
  %v1621 = vmul.f32 %v1451, %v1534
  %v1622 = vmul.f32 %v1453, %v1534
  %v1623 = vmul.f32 %v1455, %v1534
  %v1624 = vmul.f32 %v1457, %v1534
  %v1625 = vmul.f32 %v1459, %v1534
  %v1626 = vmul.f32 %v1461, %v1534
  %v1627 = vmul.f32 %v1463, %v1534
  %v1628 = vmul.f32 %v1465, %v1534
  %v1629 = vmul.f32 %v1467, %v1534
  %v1630 = vmul.f32 %v1469, %v1534
  %v1631 = vmul.f32 %v1471, %v1534
  %v1632 = vmul.f32 %v1473, %v1534
  %v1633 = vmul.f32 %v1475, %v1534
  %v1634 = vmul.f32 %v1477, %v1534
  %v1635 = vmul.f32 %v1479, %v1534
  %v1636 = vmul.f32 %v1481, %v1534
  %v1637 = vmul.f32 %v1483, %v1534
  %v1638 = vmul.f32 %v1485, %v1534
  %v1639 = vmul.f32 %v1487, %v1534
  %v1640 = vmul.f32 %v1489, %v1534
  %v1641 = vmul.f32 %v1491, %v1534
  %v1642 = vmul.f32 %v1493, %v1534
  %v1643 = vmul.f32 %v1495, %v1534
  %v1644 = vmul.f32 %v1497, %v1534
  %v1645 = vmul.f32 %v1499, %v1534
  %v1646 = vmul.f32 %v1501, %v1534
  %v1647 = vmul.f32 %v1503, %v1534
  %v1648 = vmul.f32 %v1505, %v1534
  %v1649 = vmul.f32 %v1507, %v1534
  %v1650 = vmul.f32 %v1509, %v1534
  %v1651 = vmul.f32 %v1511, %v1534
  %v1652 = vmul.f32 %v1513, %v1534
  %v1653 = vmul.f32 %v1515, %v1534
  %v1654 = vmul.f32 %v1517, %v1534
  %v1655 = vmul.f32 %v1519, %v1534
  %v1656 = vmul.f32 %v1521, %v1534
  %v1657 = vmul.f32 %v1523, %v1534
  %v1658 = vmul.f32 %v1525, %v1534
  %v1659 = vmul.f32 %v1527, %v1534
  %v1660 = vmul.f32 %v1529, %v1534
  %vm1661 = vcmask 818176
  %1662 = vst.msk [vmem:[%s5] sm:$0xff] %vm1661, %v1536
  %1663 = vst.msk [vmem:[%s5 + $0x8] sm:$0xff] %vm1661, %v1537
  %1664 = vst.msk [vmem:[%s5 + $0x10] sm:$0xff] %vm1661, %v1538
  %1665 = vst.msk [vmem:[%s5 + $0x18] sm:$0xff] %vm1661, %v1539
  %1666 = vst.msk [vmem:[%s5 + $0x20] sm:$0xff] %vm1661, %v1540
  %1667 = vst.msk [vmem:[%s5 + $0x28] sm:$0xff] %vm1661, %v1541
  %1668 = vst.msk [vmem:[%s5 + $0x30] sm:$0xff] %vm1661, %v1542
  %1669 = vst.msk [vmem:[%s5 + $0x38] sm:$0xff] %vm1661, %v1543
  %1670 = vst.msk [vmem:[%s5 + $0x40] sm:$0xff] %vm1661, %v1544
  %1671 = vst.msk [vmem:[%s5 + $0x48] sm:$0xff] %vm1661, %v1545
  %1672 = vst.msk [vmem:[%s5 + $0x50] sm:$0xff] %vm1661, %v1546
  %1673 = vst.msk [vmem:[%s5 + $0x58] sm:$0xff] %vm1661, %v1547
  %1674 = vst.msk [vmem:[%s5 + $0x60] sm:$0xff] %vm1661, %v1548
  %1675 = vst.msk [vmem:[%s5 + $0x68] sm:$0xff] %vm1661, %v1549
  %1676 = vst.msk [vmem:[%s5 + $0x70] sm:$0xff] %vm1661, %v1550
  %1677 = vst.msk [vmem:[%s5 + $0x78] sm:$0xff] %vm1661, %v1551
  %1678 = vst.msk [vmem:[%s5 + $0x80] sm:$0xff] %vm1661, %v1552
  %1679 = vst.msk [vmem:[%s5 + $0x88] sm:$0xff] %vm1661, %v1553
  %1680 = vst.msk [vmem:[%s5 + $0x90] sm:$0xff] %vm1661, %v1554
  %1681 = vst.msk [vmem:[%s5 + $0x98] sm:$0xff] %vm1661, %v1555
  %1682 = vst.msk [vmem:[%s5 + $0xa0] sm:$0xff] %vm1661, %v1556
  %1683 = vst.msk [vmem:[%s5 + $0xa8] sm:$0xff] %vm1661, %v1557
  %1684 = vst.msk [vmem:[%s5 + $0xb0] sm:$0xff] %vm1661, %v1558
  %1685 = vst.msk [vmem:[%s5 + $0xb8] sm:$0xff] %vm1661, %v1559
  %1686 = vst.msk [vmem:[%s5 + $0xc0] sm:$0xff] %vm1661, %v1560
  %1687 = vst.msk [vmem:[%s5 + $0xc8] sm:$0xff] %vm1661, %v1561
  %1688 = vst.msk [vmem:[%s5 + $0xd0] sm:$0xff] %vm1661, %v1562
  %1689 = vst.msk [vmem:[%s5 + $0xd8] sm:$0xff] %vm1661, %v1563
  %1690 = vst.msk [vmem:[%s5 + $0xe0] sm:$0xff] %vm1661, %v1564
  %1691 = vst.msk [vmem:[%s5 + $0xe8] sm:$0xff] %vm1661, %v1565
  %1692 = vst.msk [vmem:[%s5 + $0xf0] sm:$0xff] %vm1661, %v1566
  %1693 = vst.msk [vmem:[%s5 + $0xf8] sm:$0xff] %vm1661, %v1567
  %1694 = vst.msk [vmem:[%s5 + $0x100] sm:$0xff] %vm1661, %v1568
  %1695 = vst.msk [vmem:[%s5 + $0x108] sm:$0xff] %vm1661, %v1569
  %1696 = vst.msk [vmem:[%s5 + $0x110] sm:$0xff] %vm1661, %v1570
  %1697 = vst.msk [vmem:[%s5 + $0x118] sm:$0xff] %vm1661, %v1571
  %1698 = vst.msk [vmem:[%s5 + $0x120] sm:$0xff] %vm1661, %v1572
  %1699 = vst.msk [vmem:[%s5 + $0x128] sm:$0xff] %vm1661, %v1573
  %1700 = vst.msk [vmem:[%s5 + $0x130] sm:$0xff] %vm1661, %v1574
  %1701 = vst.msk [vmem:[%s5 + $0x138] sm:$0xff] %vm1661, %v1575
  %1702 = vst.msk [vmem:[%s5 + $0x140] sm:$0xff] %vm1661, %v1576
  %1703 = vst.msk [vmem:[%s5 + $0x148] sm:$0xff] %vm1661, %v1577
  %1704 = vst.msk [vmem:[%s5 + $0x150] sm:$0xff] %vm1661, %v1578
  %1705 = vst.msk [vmem:[%s5 + $0x158] sm:$0xff] %vm1661, %v1579
  %1706 = vst.msk [vmem:[%s5 + $0x160] sm:$0xff] %vm1661, %v1580
  %1707 = vst.msk [vmem:[%s5 + $0x168] sm:$0xff] %vm1661, %v1581
  %1708 = vst.msk [vmem:[%s5 + $0x170] sm:$0xff] %vm1661, %v1582
  %1709 = vst.msk [vmem:[%s5 + $0x178] sm:$0xff] %vm1661, %v1583
  %1710 = vst.msk [vmem:[%s5 + $0x180] sm:$0xff] %vm1661, %v1584
  %1711 = vst.msk [vmem:[%s5 + $0x188] sm:$0xff] %vm1661, %v1585
  %1712 = vst.msk [vmem:[%s5 + $0x190] sm:$0xff] %vm1661, %v1586
  %1713 = vst.msk [vmem:[%s5 + $0x198] sm:$0xff] %vm1661, %v1587
  %1714 = vst.msk [vmem:[%s5 + $0x1a0] sm:$0xff] %vm1661, %v1588
  %1715 = vst.msk [vmem:[%s5 + $0x1a8] sm:$0xff] %vm1661, %v1589
  %1716 = vst.msk [vmem:[%s5 + $0x1b0] sm:$0xff] %vm1661, %v1590
  %1717 = vst.msk [vmem:[%s5 + $0x1b8] sm:$0xff] %vm1661, %v1591
  %1718 = vst.msk [vmem:[%s5 + $0x1c0] sm:$0xff] %vm1661, %v1592
  %1719 = vst.msk [vmem:[%s5 + $0x1c8] sm:$0xff] %vm1661, %v1593
  %1720 = vst.msk [vmem:[%s5 + $0x1d0] sm:$0xff] %vm1661, %v1594
  %1721 = vst.msk [vmem:[%s5 + $0x1d8] sm:$0xff] %vm1661, %v1595
  %1722 = vst.msk [vmem:[%s5 + $0x1e0] sm:$0xff] %vm1661, %v1596
  %1723 = vst.msk [vmem:[%s5 + $0x1e8] sm:$0xff] %vm1661, %v1597
  %1724 = vst.msk [vmem:[%s5 + $0x1f0] sm:$0xff] %vm1661, %v1598
  %1725 = vst.msk [vmem:[%s5 + $0x1f8] sm:$0xff] %vm1661, %v1599
  %1726 = vst.msk [vmem:[%s5 + $0x200] sm:$0xff] %vm1661, %v1600
  %1727 = vst.msk [vmem:[%s5 + $0x208] sm:$0xff] %vm1661, %v1601
  %1728 = vst.msk [vmem:[%s5 + $0x210] sm:$0xff] %vm1661, %v1602
  %1729 = vst.msk [vmem:[%s5 + $0x218] sm:$0xff] %vm1661, %v1603
  %1730 = vst.msk [vmem:[%s5 + $0x220] sm:$0xff] %vm1661, %v1604
  %1731 = vst.msk [vmem:[%s5 + $0x228] sm:$0xff] %vm1661, %v1605
  %1732 = vst.msk [vmem:[%s5 + $0x230] sm:$0xff] %vm1661, %v1606
  %1733 = vst.msk [vmem:[%s5 + $0x238] sm:$0xff] %vm1661, %v1607
  %1734 = vst.msk [vmem:[%s5 + $0x240] sm:$0xff] %vm1661, %v1608
  %1735 = vst.msk [vmem:[%s5 + $0x248] sm:$0xff] %vm1661, %v1609
  %1736 = vst.msk [vmem:[%s5 + $0x250] sm:$0xff] %vm1661, %v1610
  %1737 = vst.msk [vmem:[%s5 + $0x258] sm:$0xff] %vm1661, %v1611
  %1738 = vst.msk [vmem:[%s5 + $0x260] sm:$0xff] %vm1661, %v1612
  %1739 = vst.msk [vmem:[%s5 + $0x268] sm:$0xff] %vm1661, %v1613
  %1740 = vst.msk [vmem:[%s5 + $0x270] sm:$0xff] %vm1661, %v1614
  %1741 = vst.msk [vmem:[%s5 + $0x278] sm:$0xff] %vm1661, %v1615
  %1742 = vst.msk [vmem:[%s5 + $0x280] sm:$0xff] %vm1661, %v1616
  %1743 = vst.msk [vmem:[%s5 + $0x288] sm:$0xff] %vm1661, %v1617
  %1744 = vst.msk [vmem:[%s5 + $0x290] sm:$0xff] %vm1661, %v1618
  %1745 = vst.msk [vmem:[%s5 + $0x298] sm:$0xff] %vm1661, %v1619
  %1746 = vst.msk [vmem:[%s5 + $0x2a0] sm:$0xff] %vm1661, %v1620
  %1747 = vst.msk [vmem:[%s5 + $0x2a8] sm:$0xff] %vm1661, %v1621
  %1748 = vst.msk [vmem:[%s5 + $0x2b0] sm:$0xff] %vm1661, %v1622
  %1749 = vst.msk [vmem:[%s5 + $0x2b8] sm:$0xff] %vm1661, %v1623
  %1750 = vst.msk [vmem:[%s5 + $0x2c0] sm:$0xff] %vm1661, %v1624
  %1751 = vst.msk [vmem:[%s5 + $0x2c8] sm:$0xff] %vm1661, %v1625
  %1752 = vst.msk [vmem:[%s5 + $0x2d0] sm:$0xff] %vm1661, %v1626
  %1753 = vst.msk [vmem:[%s5 + $0x2d8] sm:$0xff] %vm1661, %v1627
  %1754 = vst.msk [vmem:[%s5 + $0x2e0] sm:$0xff] %vm1661, %v1628
  %1755 = vst.msk [vmem:[%s5 + $0x2e8] sm:$0xff] %vm1661, %v1629
  %1756 = vst.msk [vmem:[%s5 + $0x2f0] sm:$0xff] %vm1661, %v1630
  %1757 = vst.msk [vmem:[%s5 + $0x2f8] sm:$0xff] %vm1661, %v1631
  %1758 = vst.msk [vmem:[%s5 + $0x300] sm:$0xff] %vm1661, %v1632
  %1759 = vst.msk [vmem:[%s5 + $0x308] sm:$0xff] %vm1661, %v1633
  %1760 = vst.msk [vmem:[%s5 + $0x310] sm:$0xff] %vm1661, %v1634
  %1761 = vst.msk [vmem:[%s5 + $0x318] sm:$0xff] %vm1661, %v1635
  %1762 = vst.msk [vmem:[%s5 + $0x320] sm:$0xff] %vm1661, %v1636
  %1763 = vst.msk [vmem:[%s5 + $0x328] sm:$0xff] %vm1661, %v1637
  %1764 = vst.msk [vmem:[%s5 + $0x330] sm:$0xff] %vm1661, %v1638
  %1765 = vst.msk [vmem:[%s5 + $0x338] sm:$0xff] %vm1661, %v1639
  %1766 = vst.msk [vmem:[%s5 + $0x340] sm:$0xff] %vm1661, %v1640
  %1767 = vst.msk [vmem:[%s5 + $0x348] sm:$0xff] %vm1661, %v1641
  %1768 = vst.msk [vmem:[%s5 + $0x350] sm:$0xff] %vm1661, %v1642
  %1769 = vst.msk [vmem:[%s5 + $0x358] sm:$0xff] %vm1661, %v1643
  %1770 = vst.msk [vmem:[%s5 + $0x360] sm:$0xff] %vm1661, %v1644
  %1771 = vst.msk [vmem:[%s5 + $0x368] sm:$0xff] %vm1661, %v1645
  %1772 = vst.msk [vmem:[%s5 + $0x370] sm:$0xff] %vm1661, %v1646
  %1773 = vst.msk [vmem:[%s5 + $0x378] sm:$0xff] %vm1661, %v1647
  %1774 = vst.msk [vmem:[%s5 + $0x380] sm:$0xff] %vm1661, %v1648
  %1775 = vst.msk [vmem:[%s5 + $0x388] sm:$0xff] %vm1661, %v1649
  %1776 = vst.msk [vmem:[%s5 + $0x390] sm:$0xff] %vm1661, %v1650
  %1777 = vst.msk [vmem:[%s5 + $0x398] sm:$0xff] %vm1661, %v1651
  %1778 = vst.msk [vmem:[%s5 + $0x3a0] sm:$0xff] %vm1661, %v1652
  %1779 = vst.msk [vmem:[%s5 + $0x3a8] sm:$0xff] %vm1661, %v1653
  %1780 = vst.msk [vmem:[%s5 + $0x3b0] sm:$0xff] %vm1661, %v1654
  %1781 = vst.msk [vmem:[%s5 + $0x3b8] sm:$0xff] %vm1661, %v1655
  %1782 = vst.msk [vmem:[%s5 + $0x3c0] sm:$0xff] %vm1661, %v1656
  %1783 = vst.msk [vmem:[%s5 + $0x3c8] sm:$0xff] %vm1661, %v1657
  %1784 = vst.msk [vmem:[%s5 + $0x3d0] sm:$0xff] %vm1661, %v1658
  %1785 = vst.msk [vmem:[%s5 + $0x3d8] sm:$0xff] %vm1661, %v1659
  %1786 = vst.msk [vmem:[%s5 + $0x3e0] sm:$0xff] %vm1661, %v1660
  %v1787 = vsel %vm1661, %v1536, 0.0
  %1788 = vadd.xlane.f32.xlu0 %v1787
  %v1789 = vpop.xlane.xlu0 %1788
  %v1790 = vsel %vm1661, %v1537, 0.0
  %1791 = vadd.xlane.f32.xlu0 %v1790
  %v1792 = vpop.xlane.xlu0 %1791
  %v1793 = vsel %vm1661, %v1538, 0.0
  %1794 = vadd.xlane.f32.xlu0 %v1793
  %v1795 = vpop.xlane.xlu0 %1794
  %v1796 = vsel %vm1661, %v1539, 0.0
  %1797 = vadd.xlane.f32.xlu0 %v1796
  %v1798 = vpop.xlane.xlu0 %1797
  %v1799 = vsel %vm1661, %v1540, 0.0
  %1800 = vadd.xlane.f32.xlu0 %v1799
  %v1801 = vpop.xlane.xlu0 %1800
  %v1802 = vsel %vm1661, %v1541, 0.0
  %1803 = vadd.xlane.f32.xlu0 %v1802
  %v1804 = vpop.xlane.xlu0 %1803
  %v1805 = vsel %vm1661, %v1542, 0.0
  %1806 = vadd.xlane.f32.xlu0 %v1805
  %v1807 = vpop.xlane.xlu0 %1806
  %v1808 = vsel %vm1661, %v1543, 0.0
  %1809 = vadd.xlane.f32.xlu0 %v1808
  %v1810 = vpop.xlane.xlu0 %1809
  %v1811 = vsel %vm1661, %v1544, 0.0
  %1812 = vadd.xlane.f32.xlu0 %v1811
  %v1813 = vpop.xlane.xlu0 %1812
  %v1814 = vsel %vm1661, %v1545, 0.0
  %1815 = vadd.xlane.f32.xlu0 %v1814
  %v1816 = vpop.xlane.xlu0 %1815
  %v1817 = vsel %vm1661, %v1546, 0.0
  %1818 = vadd.xlane.f32.xlu0 %v1817
  %v1819 = vpop.xlane.xlu0 %1818
  %v1820 = vsel %vm1661, %v1547, 0.0
  %1821 = vadd.xlane.f32.xlu0 %v1820
  %v1822 = vpop.xlane.xlu0 %1821
  %v1823 = vsel %vm1661, %v1548, 0.0
  %1824 = vadd.xlane.f32.xlu0 %v1823
  %v1825 = vpop.xlane.xlu0 %1824
  %v1826 = vsel %vm1661, %v1549, 0.0
  %1827 = vadd.xlane.f32.xlu0 %v1826
  %v1828 = vpop.xlane.xlu0 %1827
  %v1829 = vsel %vm1661, %v1550, 0.0
  %1830 = vadd.xlane.f32.xlu0 %v1829
  %v1831 = vpop.xlane.xlu0 %1830
  %v1832 = vsel %vm1661, %v1551, 0.0
  %1833 = vadd.xlane.f32.xlu0 %v1832
  %v1834 = vpop.xlane.xlu0 %1833
  %v1835 = vsel %vm1661, %v1552, 0.0
  %1836 = vadd.xlane.f32.xlu0 %v1835
  %v1837 = vpop.xlane.xlu0 %1836
  %v1838 = vsel %vm1661, %v1553, 0.0
  %1839 = vadd.xlane.f32.xlu0 %v1838
  %v1840 = vpop.xlane.xlu0 %1839
  %v1841 = vsel %vm1661, %v1554, 0.0
  %1842 = vadd.xlane.f32.xlu0 %v1841
  %v1843 = vpop.xlane.xlu0 %1842
  %v1844 = vsel %vm1661, %v1555, 0.0
  %1845 = vadd.xlane.f32.xlu0 %v1844
  %v1846 = vpop.xlane.xlu0 %1845
  %v1847 = vsel %vm1661, %v1556, 0.0
  %1848 = vadd.xlane.f32.xlu0 %v1847
  %v1849 = vpop.xlane.xlu0 %1848
  %v1850 = vsel %vm1661, %v1557, 0.0
  %1851 = vadd.xlane.f32.xlu0 %v1850
  %v1852 = vpop.xlane.xlu0 %1851
  %v1853 = vsel %vm1661, %v1558, 0.0
  %1854 = vadd.xlane.f32.xlu0 %v1853
  %v1855 = vpop.xlane.xlu0 %1854
  %v1856 = vsel %vm1661, %v1559, 0.0
  %1857 = vadd.xlane.f32.xlu0 %v1856
  %v1858 = vpop.xlane.xlu0 %1857
  %v1859 = vsel %vm1661, %v1560, 0.0
  %1860 = vadd.xlane.f32.xlu0 %v1859
  %v1861 = vpop.xlane.xlu0 %1860
  %v1862 = vsel %vm1661, %v1561, 0.0
  %1863 = vadd.xlane.f32.xlu0 %v1862
  %v1864 = vpop.xlane.xlu0 %1863
  %v1865 = vsel %vm1661, %v1562, 0.0
  %1866 = vadd.xlane.f32.xlu0 %v1865
  %v1867 = vpop.xlane.xlu0 %1866
  %v1868 = vsel %vm1661, %v1563, 0.0
  %1869 = vadd.xlane.f32.xlu0 %v1868
  %v1870 = vpop.xlane.xlu0 %1869
  %v1871 = vsel %vm1661, %v1564, 0.0
  %1872 = vadd.xlane.f32.xlu0 %v1871
  %v1873 = vpop.xlane.xlu0 %1872
  %v1874 = vsel %vm1661, %v1565, 0.0
  %1875 = vadd.xlane.f32.xlu0 %v1874
  %v1876 = vpop.xlane.xlu0 %1875
  %v1877 = vsel %vm1661, %v1566, 0.0
  %1878 = vadd.xlane.f32.xlu0 %v1877
  %v1879 = vpop.xlane.xlu0 %1878
  %v1880 = vsel %vm1661, %v1567, 0.0
  %1881 = vadd.xlane.f32.xlu0 %v1880
  %v1882 = vpop.xlane.xlu0 %1881
  %v1883 = vsel %vm1661, %v1568, 0.0
  %1884 = vadd.xlane.f32.xlu0 %v1883
  %v1885 = vpop.xlane.xlu0 %1884
  %v1886 = vsel %vm1661, %v1569, 0.0
  %1887 = vadd.xlane.f32.xlu0 %v1886
  %v1888 = vpop.xlane.xlu0 %1887
  %v1889 = vsel %vm1661, %v1570, 0.0
  %1890 = vadd.xlane.f32.xlu0 %v1889
  %v1891 = vpop.xlane.xlu0 %1890
  %v1892 = vsel %vm1661, %v1571, 0.0
  %1893 = vadd.xlane.f32.xlu0 %v1892
  %v1894 = vpop.xlane.xlu0 %1893
  %v1895 = vsel %vm1661, %v1572, 0.0
  %1896 = vadd.xlane.f32.xlu0 %v1895
  %v1897 = vpop.xlane.xlu0 %1896
  %v1898 = vsel %vm1661, %v1573, 0.0
  %1899 = vadd.xlane.f32.xlu0 %v1898
  %v1900 = vpop.xlane.xlu0 %1899
  %v1901 = vsel %vm1661, %v1574, 0.0
  %1902 = vadd.xlane.f32.xlu0 %v1901
  %v1903 = vpop.xlane.xlu0 %1902
  %v1904 = vsel %vm1661, %v1575, 0.0
  %1905 = vadd.xlane.f32.xlu0 %v1904
  %v1906 = vpop.xlane.xlu0 %1905
  %v1907 = vsel %vm1661, %v1576, 0.0
  %1908 = vadd.xlane.f32.xlu0 %v1907
  %v1909 = vpop.xlane.xlu0 %1908
  %v1910 = vsel %vm1661, %v1577, 0.0
  %1911 = vadd.xlane.f32.xlu0 %v1910
  %v1912 = vpop.xlane.xlu0 %1911
  %v1913 = vsel %vm1661, %v1578, 0.0
  %1914 = vadd.xlane.f32.xlu0 %v1913
  %v1915 = vpop.xlane.xlu0 %1914
  %v1916 = vsel %vm1661, %v1579, 0.0
  %1917 = vadd.xlane.f32.xlu0 %v1916
  %v1918 = vpop.xlane.xlu0 %1917
  %v1919 = vsel %vm1661, %v1580, 0.0
  %1920 = vadd.xlane.f32.xlu0 %v1919
  %v1921 = vpop.xlane.xlu0 %1920
  %v1922 = vsel %vm1661, %v1581, 0.0
  %1923 = vadd.xlane.f32.xlu0 %v1922
  %v1924 = vpop.xlane.xlu0 %1923
  %v1925 = vsel %vm1661, %v1582, 0.0
  %1926 = vadd.xlane.f32.xlu0 %v1925
  %v1927 = vpop.xlane.xlu0 %1926
  %v1928 = vsel %vm1661, %v1583, 0.0
  %1929 = vadd.xlane.f32.xlu0 %v1928
  %v1930 = vpop.xlane.xlu0 %1929
  %v1931 = vsel %vm1661, %v1584, 0.0
  %1932 = vadd.xlane.f32.xlu0 %v1931
  %v1933 = vpop.xlane.xlu0 %1932
  %v1934 = vsel %vm1661, %v1585, 0.0
  %1935 = vadd.xlane.f32.xlu0 %v1934
  %v1936 = vpop.xlane.xlu0 %1935
  %v1937 = vsel %vm1661, %v1586, 0.0
  %1938 = vadd.xlane.f32.xlu0 %v1937
  %v1939 = vpop.xlane.xlu0 %1938
  %v1940 = vsel %vm1661, %v1587, 0.0
  %1941 = vadd.xlane.f32.xlu0 %v1940
  %v1942 = vpop.xlane.xlu0 %1941
  %v1943 = vsel %vm1661, %v1588, 0.0
  %1944 = vadd.xlane.f32.xlu0 %v1943
  %v1945 = vpop.xlane.xlu0 %1944
  %v1946 = vsel %vm1661, %v1589, 0.0
  %1947 = vadd.xlane.f32.xlu0 %v1946
  %v1948 = vpop.xlane.xlu0 %1947
  %v1949 = vsel %vm1661, %v1590, 0.0
  %1950 = vadd.xlane.f32.xlu0 %v1949
  %v1951 = vpop.xlane.xlu0 %1950
  %v1952 = vsel %vm1661, %v1591, 0.0
  %1953 = vadd.xlane.f32.xlu0 %v1952
  %v1954 = vpop.xlane.xlu0 %1953
  %v1955 = vsel %vm1661, %v1592, 0.0
  %1956 = vadd.xlane.f32.xlu0 %v1955
  %v1957 = vpop.xlane.xlu0 %1956
  %v1958 = vsel %vm1661, %v1593, 0.0
  %1959 = vadd.xlane.f32.xlu0 %v1958
  %v1960 = vpop.xlane.xlu0 %1959
  %v1961 = vsel %vm1661, %v1594, 0.0
  %1962 = vadd.xlane.f32.xlu0 %v1961
  %v1963 = vpop.xlane.xlu0 %1962
  %v1964 = vsel %vm1661, %v1595, 0.0
  %1965 = vadd.xlane.f32.xlu0 %v1964
  %v1966 = vpop.xlane.xlu0 %1965
  %v1967 = vsel %vm1661, %v1596, 0.0
  %1968 = vadd.xlane.f32.xlu0 %v1967
  %v1969 = vpop.xlane.xlu0 %1968
  %v1970 = vsel %vm1661, %v1597, 0.0
  %1971 = vadd.xlane.f32.xlu0 %v1970
  %v1972 = vpop.xlane.xlu0 %1971
  %v1973 = vsel %vm1661, %v1598, 0.0
  %1974 = vadd.xlane.f32.xlu0 %v1973
  %v1975 = vpop.xlane.xlu0 %1974
  %v1976 = vsel %vm1661, %v1599, 0.0
  %1977 = vadd.xlane.f32.xlu0 %v1976
  %v1978 = vpop.xlane.xlu0 %1977
  %v1979 = vsel %vm1661, %v1600, 0.0
  %1980 = vadd.xlane.f32.xlu0 %v1979
  %v1981 = vpop.xlane.xlu0 %1980
  %v1982 = vsel %vm1661, %v1601, 0.0
  %1983 = vadd.xlane.f32.xlu0 %v1982
  %v1984 = vpop.xlane.xlu0 %1983
  %v1985 = vsel %vm1661, %v1602, 0.0
  %1986 = vadd.xlane.f32.xlu0 %v1985
  %v1987 = vpop.xlane.xlu0 %1986
  %v1988 = vsel %vm1661, %v1603, 0.0
  %1989 = vadd.xlane.f32.xlu0 %v1988
  %v1990 = vpop.xlane.xlu0 %1989
  %v1991 = vsel %vm1661, %v1604, 0.0
  %1992 = vadd.xlane.f32.xlu0 %v1991
  %v1993 = vpop.xlane.xlu0 %1992
  %v1994 = vsel %vm1661, %v1605, 0.0
  %1995 = vadd.xlane.f32.xlu0 %v1994
  %v1996 = vpop.xlane.xlu0 %1995
  %v1997 = vsel %vm1661, %v1606, 0.0
  %1998 = vadd.xlane.f32.xlu0 %v1997
  %v1999 = vpop.xlane.xlu0 %1998
  %v2000 = vsel %vm1661, %v1607, 0.0
  %2001 = vadd.xlane.f32.xlu0 %v2000
  %v2002 = vpop.xlane.xlu0 %2001
  %v2003 = vsel %vm1661, %v1608, 0.0
  %2004 = vadd.xlane.f32.xlu0 %v2003
  %v2005 = vpop.xlane.xlu0 %2004
  %v2006 = vsel %vm1661, %v1609, 0.0
  %2007 = vadd.xlane.f32.xlu0 %v2006
  %v2008 = vpop.xlane.xlu0 %2007
  %v2009 = vsel %vm1661, %v1610, 0.0
  %2010 = vadd.xlane.f32.xlu0 %v2009
  %v2011 = vpop.xlane.xlu0 %2010
  %v2012 = vsel %vm1661, %v1611, 0.0
  %2013 = vadd.xlane.f32.xlu0 %v2012
  %v2014 = vpop.xlane.xlu0 %2013
  %v2015 = vsel %vm1661, %v1612, 0.0
  %2016 = vadd.xlane.f32.xlu0 %v2015
  %v2017 = vpop.xlane.xlu0 %2016
  %v2018 = vsel %vm1661, %v1613, 0.0
  %2019 = vadd.xlane.f32.xlu0 %v2018
  %v2020 = vpop.xlane.xlu0 %2019
  %v2021 = vsel %vm1661, %v1614, 0.0
  %2022 = vadd.xlane.f32.xlu0 %v2021
  %v2023 = vpop.xlane.xlu0 %2022
  %v2024 = vsel %vm1661, %v1615, 0.0
  %2025 = vadd.xlane.f32.xlu0 %v2024
  %v2026 = vpop.xlane.xlu0 %2025
  %v2027 = vsel %vm1661, %v1616, 0.0
  %2028 = vadd.xlane.f32.xlu0 %v2027
  %v2029 = vpop.xlane.xlu0 %2028
  %v2030 = vsel %vm1661, %v1617, 0.0
  %2031 = vadd.xlane.f32.xlu0 %v2030
  %v2032 = vpop.xlane.xlu0 %2031
  %v2033 = vsel %vm1661, %v1618, 0.0
  %2034 = vadd.xlane.f32.xlu0 %v2033
  %v2035 = vpop.xlane.xlu0 %2034
  %v2036 = vsel %vm1661, %v1619, 0.0
  %2037 = vadd.xlane.f32.xlu0 %v2036
  %v2038 = vpop.xlane.xlu0 %2037
  %v2039 = vsel %vm1661, %v1620, 0.0
  %2040 = vadd.xlane.f32.xlu0 %v2039
  %v2041 = vpop.xlane.xlu0 %2040
  %v2042 = vsel %vm1661, %v1621, 0.0
  %2043 = vadd.xlane.f32.xlu0 %v2042
  %v2044 = vpop.xlane.xlu0 %2043
  %v2045 = vsel %vm1661, %v1622, 0.0
  %2046 = vadd.xlane.f32.xlu0 %v2045
  %v2047 = vpop.xlane.xlu0 %2046
  %v2048 = vsel %vm1661, %v1623, 0.0
  %2049 = vadd.xlane.f32.xlu0 %v2048
  %v2050 = vpop.xlane.xlu0 %2049
  %v2051 = vsel %vm1661, %v1624, 0.0
  %2052 = vadd.xlane.f32.xlu0 %v2051
  %v2053 = vpop.xlane.xlu0 %2052
  %v2054 = vsel %vm1661, %v1625, 0.0
  %2055 = vadd.xlane.f32.xlu0 %v2054
  %v2056 = vpop.xlane.xlu0 %2055
  %v2057 = vsel %vm1661, %v1626, 0.0
  %2058 = vadd.xlane.f32.xlu0 %v2057
  %v2059 = vpop.xlane.xlu0 %2058
  %v2060 = vsel %vm1661, %v1627, 0.0
  %2061 = vadd.xlane.f32.xlu0 %v2060
  %v2062 = vpop.xlane.xlu0 %2061
  %v2063 = vsel %vm1661, %v1628, 0.0
  %2064 = vadd.xlane.f32.xlu0 %v2063
  %v2065 = vpop.xlane.xlu0 %2064
  %v2066 = vsel %vm1661, %v1629, 0.0
  %2067 = vadd.xlane.f32.xlu0 %v2066
  %v2068 = vpop.xlane.xlu0 %2067
  %v2069 = vsel %vm1661, %v1630, 0.0
  %2070 = vadd.xlane.f32.xlu0 %v2069
  %v2071 = vpop.xlane.xlu0 %2070
  %v2072 = vsel %vm1661, %v1631, 0.0
  %2073 = vadd.xlane.f32.xlu0 %v2072
  %v2074 = vpop.xlane.xlu0 %2073
  %v2075 = vsel %vm1661, %v1632, 0.0
  %2076 = vadd.xlane.f32.xlu0 %v2075
  %v2077 = vpop.xlane.xlu0 %2076
  %v2078 = vsel %vm1661, %v1633, 0.0
  %2079 = vadd.xlane.f32.xlu0 %v2078
  %v2080 = vpop.xlane.xlu0 %2079
  %v2081 = vsel %vm1661, %v1634, 0.0
  %2082 = vadd.xlane.f32.xlu0 %v2081
  %v2083 = vpop.xlane.xlu0 %2082
  %v2084 = vsel %vm1661, %v1635, 0.0
  %2085 = vadd.xlane.f32.xlu0 %v2084
  %v2086 = vpop.xlane.xlu0 %2085
  %v2087 = vsel %vm1661, %v1636, 0.0
  %2088 = vadd.xlane.f32.xlu0 %v2087
  %v2089 = vpop.xlane.xlu0 %2088
  %v2090 = vsel %vm1661, %v1637, 0.0
  %2091 = vadd.xlane.f32.xlu0 %v2090
  %v2092 = vpop.xlane.xlu0 %2091
  %v2093 = vsel %vm1661, %v1638, 0.0
  %2094 = vadd.xlane.f32.xlu0 %v2093
  %v2095 = vpop.xlane.xlu0 %2094
  %v2096 = vsel %vm1661, %v1639, 0.0
  %2097 = vadd.xlane.f32.xlu0 %v2096
  %v2098 = vpop.xlane.xlu0 %2097
  %v2099 = vsel %vm1661, %v1640, 0.0
  %2100 = vadd.xlane.f32.xlu0 %v2099
  %v2101 = vpop.xlane.xlu0 %2100
  %v2102 = vsel %vm1661, %v1641, 0.0
  %2103 = vadd.xlane.f32.xlu0 %v2102
  %v2104 = vpop.xlane.xlu0 %2103
  %v2105 = vsel %vm1661, %v1642, 0.0
  %2106 = vadd.xlane.f32.xlu0 %v2105
  %v2107 = vpop.xlane.xlu0 %2106
  %v2108 = vsel %vm1661, %v1643, 0.0
  %2109 = vadd.xlane.f32.xlu0 %v2108
  %v2110 = vpop.xlane.xlu0 %2109
  %v2111 = vsel %vm1661, %v1644, 0.0
  %2112 = vadd.xlane.f32.xlu0 %v2111
  %v2113 = vpop.xlane.xlu0 %2112
  %v2114 = vsel %vm1661, %v1645, 0.0
  %2115 = vadd.xlane.f32.xlu0 %v2114
  %v2116 = vpop.xlane.xlu0 %2115
  %v2117 = vsel %vm1661, %v1646, 0.0
  %2118 = vadd.xlane.f32.xlu0 %v2117
  %v2119 = vpop.xlane.xlu0 %2118
  %v2120 = vsel %vm1661, %v1647, 0.0
  %2121 = vadd.xlane.f32.xlu0 %v2120
  %v2122 = vpop.xlane.xlu0 %2121
  %v2123 = vsel %vm1661, %v1648, 0.0
  %2124 = vadd.xlane.f32.xlu0 %v2123
  %v2125 = vpop.xlane.xlu0 %2124
  %v2126 = vsel %vm1661, %v1649, 0.0
  %2127 = vadd.xlane.f32.xlu0 %v2126
  %v2128 = vpop.xlane.xlu0 %2127
  %v2129 = vsel %vm1661, %v1650, 0.0
  %2130 = vadd.xlane.f32.xlu0 %v2129
  %v2131 = vpop.xlane.xlu0 %2130
  %v2132 = vsel %vm1661, %v1651, 0.0
  %2133 = vadd.xlane.f32.xlu0 %v2132
  %v2134 = vpop.xlane.xlu0 %2133
  %v2135 = vsel %vm1661, %v1652, 0.0
  %2136 = vadd.xlane.f32.xlu0 %v2135
  %v2137 = vpop.xlane.xlu0 %2136
  %v2138 = vsel %vm1661, %v1653, 0.0
  %2139 = vadd.xlane.f32.xlu0 %v2138
  %v2140 = vpop.xlane.xlu0 %2139
  %v2141 = vsel %vm1661, %v1654, 0.0
  %2142 = vadd.xlane.f32.xlu0 %v2141
  %v2143 = vpop.xlane.xlu0 %2142
  %v2144 = vsel %vm1661, %v1655, 0.0
  %2145 = vadd.xlane.f32.xlu0 %v2144
  %v2146 = vpop.xlane.xlu0 %2145
  %v2147 = vsel %vm1661, %v1656, 0.0
  %2148 = vadd.xlane.f32.xlu0 %v2147
  %v2149 = vpop.xlane.xlu0 %2148
  %v2150 = vsel %vm1661, %v1657, 0.0
  %2151 = vadd.xlane.f32.xlu0 %v2150
  %v2152 = vpop.xlane.xlu0 %2151
  %v2153 = vsel %vm1661, %v1658, 0.0
  %2154 = vadd.xlane.f32.xlu0 %v2153
  %v2155 = vpop.xlane.xlu0 %2154
  %v2156 = vsel %vm1661, %v1659, 0.0
  %2157 = vadd.xlane.f32.xlu0 %v2156
  %v2158 = vpop.xlane.xlu0 %2157
  %v2159 = vsel %vm1661, %v1660, 0.0
  %2160 = vadd.xlane.f32.xlu0 %v2159
  %v2161 = vpop.xlane.xlu0 %2160
  %v2163 = vlaneseq
  %v2164 = vshrl.u32 %v2163, 7
  %v2165 = vsub.s32 0, %v2164
  %v2166 = vrot.slane %v148, %v2165
  %v2168 = vadd.f32 %v1789, %v2166
  %v2169 = vadd.f32 %v1792, %v2166
  %v2170 = vadd.f32 %v1795, %v2166
  %v2171 = vadd.f32 %v1798, %v2166
  %v2172 = vadd.f32 %v1801, %v2166
  %v2173 = vadd.f32 %v1804, %v2166
  %v2174 = vadd.f32 %v1807, %v2166
  %v2175 = vadd.f32 %v1810, %v2166
  %v2176 = vadd.f32 %v1813, %v2166
  %v2177 = vadd.f32 %v1816, %v2166
  %v2178 = vadd.f32 %v1819, %v2166
  %v2179 = vadd.f32 %v1822, %v2166
  %v2180 = vadd.f32 %v1825, %v2166
  %v2181 = vadd.f32 %v1828, %v2166
  %v2182 = vadd.f32 %v1831, %v2166
  %v2183 = vadd.f32 %v1834, %v2166
  %v2184 = vadd.f32 %v1837, %v2166
  %v2185 = vadd.f32 %v1840, %v2166
  %v2186 = vadd.f32 %v1843, %v2166
  %v2187 = vadd.f32 %v1846, %v2166
  %v2188 = vadd.f32 %v1849, %v2166
  %v2189 = vadd.f32 %v1852, %v2166
  %v2190 = vadd.f32 %v1855, %v2166
  %v2191 = vadd.f32 %v1858, %v2166
  %v2192 = vadd.f32 %v1861, %v2166
  %v2193 = vadd.f32 %v1864, %v2166
  %v2194 = vadd.f32 %v1867, %v2166
  %v2195 = vadd.f32 %v1870, %v2166
  %v2196 = vadd.f32 %v1873, %v2166
  %v2197 = vadd.f32 %v1876, %v2166
  %v2198 = vadd.f32 %v1879, %v2166
  %v2199 = vadd.f32 %v1882, %v2166
  %v2200 = vadd.f32 %v1885, %v2166
  %v2201 = vadd.f32 %v1888, %v2166
  %v2202 = vadd.f32 %v1891, %v2166
  %v2203 = vadd.f32 %v1894, %v2166
  %v2204 = vadd.f32 %v1897, %v2166
  %v2205 = vadd.f32 %v1900, %v2166
  %v2206 = vadd.f32 %v1903, %v2166
  %v2207 = vadd.f32 %v1906, %v2166
  %v2208 = vadd.f32 %v1909, %v2166
  %v2209 = vadd.f32 %v1912, %v2166
  %v2210 = vadd.f32 %v1915, %v2166
  %v2211 = vadd.f32 %v1918, %v2166
  %v2212 = vadd.f32 %v1921, %v2166
  %v2213 = vadd.f32 %v1924, %v2166
  %v2214 = vadd.f32 %v1927, %v2166
  %v2215 = vadd.f32 %v1930, %v2166
  %v2216 = vadd.f32 %v1933, %v2166
  %v2217 = vadd.f32 %v1936, %v2166
  %v2218 = vadd.f32 %v1939, %v2166
  %v2219 = vadd.f32 %v1942, %v2166
  %v2220 = vadd.f32 %v1945, %v2166
  %v2221 = vadd.f32 %v1948, %v2166
  %v2222 = vadd.f32 %v1951, %v2166
  %v2223 = vadd.f32 %v1954, %v2166
  %v2224 = vadd.f32 %v1957, %v2166
  %v2225 = vadd.f32 %v1960, %v2166
  %v2226 = vadd.f32 %v1963, %v2166
  %v2227 = vadd.f32 %v1966, %v2166
  %v2228 = vadd.f32 %v1969, %v2166
  %v2229 = vadd.f32 %v1972, %v2166
  %v2230 = vadd.f32 %v1975, %v2166
  %v2231 = vadd.f32 %v1978, %v2166
  %v2232 = vadd.f32 %v1981, %v2166
  %v2233 = vadd.f32 %v1984, %v2166
  %v2234 = vadd.f32 %v1987, %v2166
  %v2235 = vadd.f32 %v1990, %v2166
  %v2236 = vadd.f32 %v1993, %v2166
  %v2237 = vadd.f32 %v1996, %v2166
  %v2238 = vadd.f32 %v1999, %v2166
  %v2239 = vadd.f32 %v2002, %v2166
  %v2240 = vadd.f32 %v2005, %v2166
  %v2241 = vadd.f32 %v2008, %v2166
  %v2242 = vadd.f32 %v2011, %v2166
  %v2243 = vadd.f32 %v2014, %v2166
  %v2244 = vadd.f32 %v2017, %v2166
  %v2245 = vadd.f32 %v2020, %v2166
  %v2246 = vadd.f32 %v2023, %v2166
  %v2247 = vadd.f32 %v2026, %v2166
  %v2248 = vadd.f32 %v2029, %v2166
  %v2249 = vadd.f32 %v2032, %v2166
  %v2250 = vadd.f32 %v2035, %v2166
  %v2251 = vadd.f32 %v2038, %v2166
  %v2252 = vadd.f32 %v2041, %v2166
  %v2253 = vadd.f32 %v2044, %v2166
  %v2254 = vadd.f32 %v2047, %v2166
  %v2255 = vadd.f32 %v2050, %v2166
  %v2256 = vadd.f32 %v2053, %v2166
  %v2257 = vadd.f32 %v2056, %v2166
  %v2258 = vadd.f32 %v2059, %v2166
  %v2259 = vadd.f32 %v2062, %v2166
  %v2260 = vadd.f32 %v2065, %v2166
  %v2261 = vadd.f32 %v2068, %v2166
  %v2262 = vadd.f32 %v2071, %v2166
  %v2263 = vadd.f32 %v2074, %v2166
  %v2264 = vadd.f32 %v2077, %v2166
  %v2265 = vadd.f32 %v2080, %v2166
  %v2266 = vadd.f32 %v2083, %v2166
  %v2267 = vadd.f32 %v2086, %v2166
  %v2268 = vadd.f32 %v2089, %v2166
  %v2269 = vadd.f32 %v2092, %v2166
  %v2270 = vadd.f32 %v2095, %v2166
  %v2271 = vadd.f32 %v2098, %v2166
  %v2272 = vadd.f32 %v2101, %v2166
  %v2273 = vadd.f32 %v2104, %v2166
  %v2274 = vadd.f32 %v2107, %v2166
  %v2275 = vadd.f32 %v2110, %v2166
  %v2276 = vadd.f32 %v2113, %v2166
  %v2277 = vadd.f32 %v2116, %v2166
  %v2278 = vadd.f32 %v2119, %v2166
  %v2279 = vadd.f32 %v2122, %v2166
  %v2280 = vadd.f32 %v2125, %v2166
  %v2281 = vadd.f32 %v2128, %v2166
  %v2282 = vadd.f32 %v2131, %v2166
  %v2283 = vadd.f32 %v2134, %v2166
  %v2284 = vadd.f32 %v2137, %v2166
  %v2285 = vadd.f32 %v2140, %v2166
  %v2286 = vadd.f32 %v2143, %v2166
  %v2287 = vadd.f32 %v2146, %v2166
  %v2288 = vadd.f32 %v2149, %v2166
  %v2289 = vadd.f32 %v2152, %v2166
  %v2290 = vadd.f32 %v2155, %v2166
  %v2291 = vadd.f32 %v2158, %v2166
  %v2292 = vadd.f32 %v2161, %v2166
  %vm2293 = vcmask 7168
  %2294 = vst.msk [vmem:[%s4] sm:$0xff] %vm2293, %v2168
  %2295 = vst.msk [vmem:[%s4 + $0x8] sm:$0xff] %vm2293, %v2169
  %2296 = vst.msk [vmem:[%s4 + $0x10] sm:$0xff] %vm2293, %v2170
  %2297 = vst.msk [vmem:[%s4 + $0x18] sm:$0xff] %vm2293, %v2171
  %2298 = vst.msk [vmem:[%s4 + $0x20] sm:$0xff] %vm2293, %v2172
  %2299 = vst.msk [vmem:[%s4 + $0x28] sm:$0xff] %vm2293, %v2173
  %2300 = vst.msk [vmem:[%s4 + $0x30] sm:$0xff] %vm2293, %v2174
  %2301 = vst.msk [vmem:[%s4 + $0x38] sm:$0xff] %vm2293, %v2175
  %2302 = vst.msk [vmem:[%s4 + $0x40] sm:$0xff] %vm2293, %v2176
  %2303 = vst.msk [vmem:[%s4 + $0x48] sm:$0xff] %vm2293, %v2177
  %2304 = vst.msk [vmem:[%s4 + $0x50] sm:$0xff] %vm2293, %v2178
  %2305 = vst.msk [vmem:[%s4 + $0x58] sm:$0xff] %vm2293, %v2179
  %2306 = vst.msk [vmem:[%s4 + $0x60] sm:$0xff] %vm2293, %v2180
  %2307 = vst.msk [vmem:[%s4 + $0x68] sm:$0xff] %vm2293, %v2181
  %2308 = vst.msk [vmem:[%s4 + $0x70] sm:$0xff] %vm2293, %v2182
  %2309 = vst.msk [vmem:[%s4 + $0x78] sm:$0xff] %vm2293, %v2183
  %2310 = vst.msk [vmem:[%s4 + $0x80] sm:$0xff] %vm2293, %v2184
  %2311 = vst.msk [vmem:[%s4 + $0x88] sm:$0xff] %vm2293, %v2185
  %2312 = vst.msk [vmem:[%s4 + $0x90] sm:$0xff] %vm2293, %v2186
  %2313 = vst.msk [vmem:[%s4 + $0x98] sm:$0xff] %vm2293, %v2187
  %2314 = vst.msk [vmem:[%s4 + $0xa0] sm:$0xff] %vm2293, %v2188
  %2315 = vst.msk [vmem:[%s4 + $0xa8] sm:$0xff] %vm2293, %v2189
  %2316 = vst.msk [vmem:[%s4 + $0xb0] sm:$0xff] %vm2293, %v2190
  %2317 = vst.msk [vmem:[%s4 + $0xb8] sm:$0xff] %vm2293, %v2191
  %2318 = vst.msk [vmem:[%s4 + $0xc0] sm:$0xff] %vm2293, %v2192
  %2319 = vst.msk [vmem:[%s4 + $0xc8] sm:$0xff] %vm2293, %v2193
  %2320 = vst.msk [vmem:[%s4 + $0xd0] sm:$0xff] %vm2293, %v2194
  %2321 = vst.msk [vmem:[%s4 + $0xd8] sm:$0xff] %vm2293, %v2195
  %2322 = vst.msk [vmem:[%s4 + $0xe0] sm:$0xff] %vm2293, %v2196
  %2323 = vst.msk [vmem:[%s4 + $0xe8] sm:$0xff] %vm2293, %v2197
  %2324 = vst.msk [vmem:[%s4 + $0xf0] sm:$0xff] %vm2293, %v2198
  %2325 = vst.msk [vmem:[%s4 + $0xf8] sm:$0xff] %vm2293, %v2199
  %2326 = vst.msk [vmem:[%s4 + $0x100] sm:$0xff] %vm2293, %v2200
  %2327 = vst.msk [vmem:[%s4 + $0x108] sm:$0xff] %vm2293, %v2201
  %2328 = vst.msk [vmem:[%s4 + $0x110] sm:$0xff] %vm2293, %v2202
  %2329 = vst.msk [vmem:[%s4 + $0x118] sm:$0xff] %vm2293, %v2203
  %2330 = vst.msk [vmem:[%s4 + $0x120] sm:$0xff] %vm2293, %v2204
  %2331 = vst.msk [vmem:[%s4 + $0x128] sm:$0xff] %vm2293, %v2205
  %2332 = vst.msk [vmem:[%s4 + $0x130] sm:$0xff] %vm2293, %v2206
  %2333 = vst.msk [vmem:[%s4 + $0x138] sm:$0xff] %vm2293, %v2207
  %2334 = vst.msk [vmem:[%s4 + $0x140] sm:$0xff] %vm2293, %v2208
  %2335 = vst.msk [vmem:[%s4 + $0x148] sm:$0xff] %vm2293, %v2209
  %2336 = vst.msk [vmem:[%s4 + $0x150] sm:$0xff] %vm2293, %v2210
  %2337 = vst.msk [vmem:[%s4 + $0x158] sm:$0xff] %vm2293, %v2211
  %2338 = vst.msk [vmem:[%s4 + $0x160] sm:$0xff] %vm2293, %v2212
  %2339 = vst.msk [vmem:[%s4 + $0x168] sm:$0xff] %vm2293, %v2213
  %2340 = vst.msk [vmem:[%s4 + $0x170] sm:$0xff] %vm2293, %v2214
  %2341 = vst.msk [vmem:[%s4 + $0x178] sm:$0xff] %vm2293, %v2215
  %2342 = vst.msk [vmem:[%s4 + $0x180] sm:$0xff] %vm2293, %v2216
  %2343 = vst.msk [vmem:[%s4 + $0x188] sm:$0xff] %vm2293, %v2217
  %2344 = vst.msk [vmem:[%s4 + $0x190] sm:$0xff] %vm2293, %v2218
  %2345 = vst.msk [vmem:[%s4 + $0x198] sm:$0xff] %vm2293, %v2219
  %2346 = vst.msk [vmem:[%s4 + $0x1a0] sm:$0xff] %vm2293, %v2220
  %2347 = vst.msk [vmem:[%s4 + $0x1a8] sm:$0xff] %vm2293, %v2221
  %2348 = vst.msk [vmem:[%s4 + $0x1b0] sm:$0xff] %vm2293, %v2222
  %2349 = vst.msk [vmem:[%s4 + $0x1b8] sm:$0xff] %vm2293, %v2223
  %2350 = vst.msk [vmem:[%s4 + $0x1c0] sm:$0xff] %vm2293, %v2224
  %2351 = vst.msk [vmem:[%s4 + $0x1c8] sm:$0xff] %vm2293, %v2225
  %2352 = vst.msk [vmem:[%s4 + $0x1d0] sm:$0xff] %vm2293, %v2226
  %2353 = vst.msk [vmem:[%s4 + $0x1d8] sm:$0xff] %vm2293, %v2227
  %2354 = vst.msk [vmem:[%s4 + $0x1e0] sm:$0xff] %vm2293, %v2228
  %2355 = vst.msk [vmem:[%s4 + $0x1e8] sm:$0xff] %vm2293, %v2229
  %2356 = vst.msk [vmem:[%s4 + $0x1f0] sm:$0xff] %vm2293, %v2230
  %2357 = vst.msk [vmem:[%s4 + $0x1f8] sm:$0xff] %vm2293, %v2231
  %2358 = vst.msk [vmem:[%s4 + $0x200] sm:$0xff] %vm2293, %v2232
  %2359 = vst.msk [vmem:[%s4 + $0x208] sm:$0xff] %vm2293, %v2233
  %2360 = vst.msk [vmem:[%s4 + $0x210] sm:$0xff] %vm2293, %v2234
  %2361 = vst.msk [vmem:[%s4 + $0x218] sm:$0xff] %vm2293, %v2235
  %2362 = vst.msk [vmem:[%s4 + $0x220] sm:$0xff] %vm2293, %v2236
  %2363 = vst.msk [vmem:[%s4 + $0x228] sm:$0xff] %vm2293, %v2237
  %2364 = vst.msk [vmem:[%s4 + $0x230] sm:$0xff] %vm2293, %v2238
  %2365 = vst.msk [vmem:[%s4 + $0x238] sm:$0xff] %vm2293, %v2239
  %2366 = vst.msk [vmem:[%s4 + $0x240] sm:$0xff] %vm2293, %v2240
  %2367 = vst.msk [vmem:[%s4 + $0x248] sm:$0xff] %vm2293, %v2241
  %2368 = vst.msk [vmem:[%s4 + $0x250] sm:$0xff] %vm2293, %v2242
  %2369 = vst.msk [vmem:[%s4 + $0x258] sm:$0xff] %vm2293, %v2243
  %2370 = vst.msk [vmem:[%s4 + $0x260] sm:$0xff] %vm2293, %v2244
  %2371 = vst.msk [vmem:[%s4 + $0x268] sm:$0xff] %vm2293, %v2245
  %2372 = vst.msk [vmem:[%s4 + $0x270] sm:$0xff] %vm2293, %v2246
  %2373 = vst.msk [vmem:[%s4 + $0x278] sm:$0xff] %vm2293, %v2247
  %2374 = vst.msk [vmem:[%s4 + $0x280] sm:$0xff] %vm2293, %v2248
  %2375 = vst.msk [vmem:[%s4 + $0x288] sm:$0xff] %vm2293, %v2249
  %2376 = vst.msk [vmem:[%s4 + $0x290] sm:$0xff] %vm2293, %v2250
  %2377 = vst.msk [vmem:[%s4 + $0x298] sm:$0xff] %vm2293, %v2251
  %2378 = vst.msk [vmem:[%s4 + $0x2a0] sm:$0xff] %vm2293, %v2252
  %2379 = vst.msk [vmem:[%s4 + $0x2a8] sm:$0xff] %vm2293, %v2253
  %2380 = vst.msk [vmem:[%s4 + $0x2b0] sm:$0xff] %vm2293, %v2254
  %2381 = vst.msk [vmem:[%s4 + $0x2b8] sm:$0xff] %vm2293, %v2255
  %2382 = vst.msk [vmem:[%s4 + $0x2c0] sm:$0xff] %vm2293, %v2256
  %2383 = vst.msk [vmem:[%s4 + $0x2c8] sm:$0xff] %vm2293, %v2257
  %2384 = vst.msk [vmem:[%s4 + $0x2d0] sm:$0xff] %vm2293, %v2258
  %2385 = vst.msk [vmem:[%s4 + $0x2d8] sm:$0xff] %vm2293, %v2259
  %2386 = vst.msk [vmem:[%s4 + $0x2e0] sm:$0xff] %vm2293, %v2260
  %2387 = vst.msk [vmem:[%s4 + $0x2e8] sm:$0xff] %vm2293, %v2261
  %2388 = vst.msk [vmem:[%s4 + $0x2f0] sm:$0xff] %vm2293, %v2262
  %2389 = vst.msk [vmem:[%s4 + $0x2f8] sm:$0xff] %vm2293, %v2263
  %2390 = vst.msk [vmem:[%s4 + $0x300] sm:$0xff] %vm2293, %v2264
  %2391 = vst.msk [vmem:[%s4 + $0x308] sm:$0xff] %vm2293, %v2265
  %2392 = vst.msk [vmem:[%s4 + $0x310] sm:$0xff] %vm2293, %v2266
  %2393 = vst.msk [vmem:[%s4 + $0x318] sm:$0xff] %vm2293, %v2267
  %2394 = vst.msk [vmem:[%s4 + $0x320] sm:$0xff] %vm2293, %v2268
  %2395 = vst.msk [vmem:[%s4 + $0x328] sm:$0xff] %vm2293, %v2269
  %2396 = vst.msk [vmem:[%s4 + $0x330] sm:$0xff] %vm2293, %v2270
  %2397 = vst.msk [vmem:[%s4 + $0x338] sm:$0xff] %vm2293, %v2271
  %2398 = vst.msk [vmem:[%s4 + $0x340] sm:$0xff] %vm2293, %v2272
  %2399 = vst.msk [vmem:[%s4 + $0x348] sm:$0xff] %vm2293, %v2273
  %2400 = vst.msk [vmem:[%s4 + $0x350] sm:$0xff] %vm2293, %v2274
  %2401 = vst.msk [vmem:[%s4 + $0x358] sm:$0xff] %vm2293, %v2275
  %2402 = vst.msk [vmem:[%s4 + $0x360] sm:$0xff] %vm2293, %v2276
  %2403 = vst.msk [vmem:[%s4 + $0x368] sm:$0xff] %vm2293, %v2277
  %2404 = vst.msk [vmem:[%s4 + $0x370] sm:$0xff] %vm2293, %v2278
  %2405 = vst.msk [vmem:[%s4 + $0x378] sm:$0xff] %vm2293, %v2279
  %2406 = vst.msk [vmem:[%s4 + $0x380] sm:$0xff] %vm2293, %v2280
  %2407 = vst.msk [vmem:[%s4 + $0x388] sm:$0xff] %vm2293, %v2281
  %2408 = vst.msk [vmem:[%s4 + $0x390] sm:$0xff] %vm2293, %v2282
  %2409 = vst.msk [vmem:[%s4 + $0x398] sm:$0xff] %vm2293, %v2283
  %2410 = vst.msk [vmem:[%s4 + $0x3a0] sm:$0xff] %vm2293, %v2284
  %2411 = vst.msk [vmem:[%s4 + $0x3a8] sm:$0xff] %vm2293, %v2285
  %2412 = vst.msk [vmem:[%s4 + $0x3b0] sm:$0xff] %vm2293, %v2286
  %2413 = vst.msk [vmem:[%s4 + $0x3b8] sm:$0xff] %vm2293, %v2287
  %2414 = vst.msk [vmem:[%s4 + $0x3c0] sm:$0xff] %vm2293, %v2288
  %2415 = vst.msk [vmem:[%s4 + $0x3c8] sm:$0xff] %vm2293, %v2289
  %2416 = vst.msk [vmem:[%s4 + $0x3d0] sm:$0xff] %vm2293, %v2290
  %2417 = vst.msk [vmem:[%s4 + $0x3d8] sm:$0xff] %vm2293, %v2291
  %2418 = vst.msk [vmem:[%s4 + $0x3e0] sm:$0xff] %vm2293, %v2292
  // Predicated region
  $region18: #{tpu_custom_call.1} parent=0 // pred_check
    _
  $region19: #{tpu_custom_call.1} parent=0 // pred_check_branch
    %2420 = sbr.rel (0) target = $region21
  $region20: #{tpu_custom_call.1} parent=0 // pred_region
    _
  $region21: #{tpu_custom_call.1} parent=0 // pred_fallthru
    _
  // Predicated region
  $region22: #{tpu_custom_call.1} parent=0 // pred_check
    _
  $region23: #{tpu_custom_call.1} parent=0 // pred_check_branch
    %2422 = sbr.rel (0) target = $region25
  $region24: #{tpu_custom_call.1} parent=0 // pred_region
    _
  $region25: #{tpu_custom_call.1} parent=0 // pred_fallthru
    _
  // Predicated region
  $region26: #{tpu_custom_call.1} parent=0 // pred_check
    _
  $region27: #{tpu_custom_call.1} parent=0 // pred_check_branch
    %2424 = sbr.rel (0) target = $region29
  $region28: #{tpu_custom_call.1} parent=0 // pred_region
    _
  $region29: #{tpu_custom_call.1} parent=0 // pred_fallthru
    _
  // Predicated region
  $region30: #{tpu_custom_call.1} parent=0 // pred_check
    _
  $region31: #{tpu_custom_call.1} parent=0 // pred_check_branch
    %2426 = sbr.rel (0) target = $region33
  $region32: #{tpu_custom_call.1} parent=0 // pred_region
    _
  $region33: #{tpu_custom_call.1} parent=0 // pred_fallthru
    _

</llo_original>
